<compile_context>
chip_gen: v6e
topology: v6e:2x2x1
jax: 0.10.0
libtpu: 0.0.40
codegen_flags: <defaults>
</compile_context>

<pallas_src>
import jax
import jax.numpy as jnp
from jax import lax
from jax.experimental import pallas as pl
from jax.experimental.pallas import tpu as pltpu


def _vmem():
    return pl.BlockSpec(memory_space=pltpu.MemorySpace.VMEM)


# -----------------------------------------------------------------------------
# Fused kernel: conv -> input projection -> BiLSTM -> hidden2tag -> CRF NLL
# -----------------------------------------------------------------------------
def fused_kernel(emb_ref, wconv_ref, bconv_ref, wih_ref, bih_ref,
                 whh_ref, wtag_ref, btag_ref,
                 trans_ref, start_ref, end_ref, tags_ref, mask_ref,
                 loss_ref,
                 gi_sc, em_sc, h_bd, c_sc):
    # emb_ref:   (S, B, E)   bf16, time-major
    # wconv_ref: (3, E, H)   bf16  (tap, in, out)
    # bconv_ref: (1, H)      f32
    # wih_ref:   (H, 8*Hh)   bf16  cols = [fwd i,f,g,o | bwd i,f,g,o]
    # bih_ref:   (1, 8*Hh)   f32   (b_ih + b_hh per direction, concatenated)
    # whh_ref:   (2*Hh, 4*Hh) bf16 rows = vstack(W_hh_f^T, W_hh_b^T)
    # wtag_ref:  (2*Hh, L)   bf16
    # btag_ref:  (1, L) | trans (L,L) | start/end (1,L) f32
    # tags_ref:  (S, B, 1) int32 ; mask_ref: (S, B, 1) f32
    # loss_ref:  (1, 1) f32
    S, B, E = emb_ref.shape
    H = wconv_ref.shape[2]
    G8 = wih_ref.shape[1]
    Hh = G8 // 8
    G4 = 4 * Hh
    L = trans_ref.shape[0]

    # ---- Conv2d(1,H,(3,E),padding=(1,0)) as 3 matmuls + in-kernel time shifts ----
    x = emb_ref[...]                                                  # (S,B,E) bf16
    y0 = jnp.einsum('sbe,eh->sbh', x, wconv_ref[0],
                    preferred_element_type=jnp.float32)
    y1 = jnp.einsum('sbe,eh->sbh', x, wconv_ref[1],
                    preferred_element_type=jnp.float32)
    y2 = jnp.einsum('sbe,eh->sbh', x, wconv_ref[2],
                    preferred_element_type=jnp.float32)
    zrow = jnp.zeros((1, B, H), jnp.float32)
    cnn = (y1 + bconv_ref[...][None, :, :]
           + jnp.concatenate([zrow, y0[:S - 1]], axis=0)              # x[s-1] @ W0
           + jnp.concatenate([y2[1:], zrow], axis=0))                 # x[s+1] @ W2
    # TODO(synk): nn.Dropout(0.5) in the training branch treated as identity.

    # ---- Hoisted LSTM input projection (both directions, one big matmul) ---------
    proj = jnp.einsum('sbh,hg->sbg', cnn.astype(jnp.bfloat16), wih_ref[...],
                      preferred_element_type=jnp.float32)             # (S,B,8Hh)
    gi_sc[...] = proj + bih_ref[...][None, :, :]

    # ---- Init recurrent state + emissions accumulator (linear bias) --------------
    h_bd[...] = jnp.zeros(h_bd.shape, jnp.float32)     # block-diag [h_f|0 ; 0|h_b]
    c_sc[...] = jnp.zeros(c_sc.shape, jnp.float32)     # stacked [c_f ; c_b]
    em_sc[...] = jnp.broadcast_to(btag_ref[...].reshape(1, 1, L), (S, B, L))

    whh = whh_ref[...]                                  # (2Hh,4Hh) bf16 (hoisted)
    wtag = wtag_ref[...]                                # (2Hh,L)   bf16 (hoisted)

    # ---- BiLSTM recurrence: forward step t and backward step S-1-t, fused --------
    def lstm_step(t, carry):
        gf = gi_sc[t][:, 0:G4]                          # (B,4Hh) fwd x-proj @ t
        gb = gi_sc[S - 1 - t][:, G4:G8]                 # (B,4Hh) bwd x-proj @ S-1-t
        h_prev = h_bd[...].astype(jnp.bfloat16)         # (2B,2Hh) block-diagonal
        gates = (jnp.concatenate([gf, gb], axis=0)
                 + jnp.dot(h_prev, whh, preferred_element_type=jnp.float32))
        i_g = jax.nn.sigmoid(gates[:, 0 * Hh:1 * Hh])   # PyTorch gate order i,f,g,o
        f_g = jax.nn.sigmoid(gates[:, 1 * Hh:2 * Hh])
        g_g = jnp.tanh(gates[:, 2 * Hh:3 * Hh])
        o_g = jax.nn.sigmoid(gates[:, 3 * Hh:4 * Hh])
        c_new = f_g * c_sc[...] + i_g * g_g
        h_new = o_g * jnp.tanh(c_new)                   # (2B,Hh) f32
        c_sc[...] = c_new
        h_bd[0:B, 0:Hh] = h_new[0:B]                    # fwd block
        h_bd[B:2 * B, Hh:2 * Hh] = h_new[B:2 * B]       # bwd block (off-diag stays 0)
        # Fused hidden2tag: block-diag h @ W_tag -> per-direction contributions.
        em_c = jnp.dot(h_bd[...].astype(jnp.bfloat16), wtag,
                       preferred_element_type=jnp.float32)            # (2B,L)
        em_sc[t] = em_sc[t] + em_c[0:B]                       # fwd half -> time t
        em_sc[S - 1 - t] = em_sc[S - 1 - t] + em_c[B:2 * B]   # bwd half -> S-1-t
        return carry

    lax.fori_loop(0, S, lstm_step, 0)

    # ---- CRF negative log-likelihood (torchcrf semantics, reduction='mean') ------
    trans = trans_ref[...]                               # (L,L)
    trans_b = trans[None, :, :]                          # hoisted invariant broadcast
    start = start_ref[...]                               # (1,L)
    end = end_ref[...]
    lbl_iota = lax.broadcasted_iota(jnp.int32, (B, L), 1)

    def onehot(t):
        return (lbl_iota == tags_ref[t]).astype(jnp.float32)          # (B,L)

    em0 = em_sc[0]
    oh0 = onehot(0)
    score0 = jnp.sum((start + em0) * oh0, axis=1, keepdims=True)      # numerator (B,1)
    alpha0 = start + em0                                              # denominator (B,L)

    def crf_step(t, carry):
        score, alpha, oh_prev = carry
        m = mask_ref[t]                                  # (B,1)
        em_t = em_sc[t]                                  # (B,L)
        oh_t = onehot(t)
        trans_contrib = jnp.sum(
            jnp.dot(oh_prev, trans, preferred_element_type=jnp.float32) * oh_t,
            axis=1, keepdims=True)
        emit_contrib = jnp.sum(em_t * oh_t, axis=1, keepdims=True)
        score = score + m * (trans_contrib + emit_contrib)
        # alpha[b,k] <- logsumexp_j(alpha[b,j] + trans[j,k]) + em_t[b,k]
        broad = alpha[:, :, None] + trans_b + em_t[:, None, :]        # (B,L,L)
        mmax = jnp.max(broad, axis=1)                                 # (B,L)
        nxt = mmax + jnp.log(jnp.sum(jnp.exp(broad - mmax[:, None, :]), axis=1))
        alpha = jnp.where(m > 0.0, nxt, alpha)
        oh_prev = jnp.where(m > 0.0, oh_t, oh_prev)      # tag at last valid position
        return score, alpha, oh_prev

    score, alpha, oh_last = lax.fori_loop(1, S, crf_step, (score0, alpha0, oh0))

    score = score + jnp.sum(end * oh_last, axis=1, keepdims=True)
    alpha = alpha + end
    amax = jnp.max(alpha, axis=1, keepdims=True)
    denom = amax + jnp.log(jnp.sum(jnp.exp(alpha - amax), axis=1, keepdims=True))
    loss_ref[...] = -jnp.sum(score - denom, axis=0, keepdims=True) / B


# -----------------------------------------------------------------------------
# Parameters and wrapper
# -----------------------------------------------------------------------------
def init_params(key, vocab_size, E, H, L):
    Hh = H // 2
    ks = jax.random.split(key, 16)
    u = lambda k, shape, s: jax.random.uniform(k, shape, jnp.float32, -s, s)
    return dict(
        emb_table=jax.random.normal(ks[0], (vocab_size, E), jnp.float32) * 0.02,
        w_conv=u(ks[1], (H, 1, 3, E), 0.05),
        b_conv=u(ks[2], (H,), 0.05),
        w_ih_f=u(ks[3], (4 * Hh, H), 0.1), w_hh_f=u(ks[4], (4 * Hh, Hh), 0.1),
        b_ih_f=u(ks[5], (4 * Hh,), 0.1),   b_hh_f=u(ks[6], (4 * Hh,), 0.1),
        w_ih_b=u(ks[7], (4 * Hh, H), 0.1), w_hh_b=u(ks[8], (4 * Hh, Hh), 0.1),
        b_ih_b=u(ks[9], (4 * Hh,), 0.1),   b_hh_b=u(ks[10], (4 * Hh,), 0.1),
        w_tag=u(ks[11], (L, H), 0.1),      b_tag=u(ks[12], (L,), 0.1),
        crf_start=u(ks[13], (L,), 0.1), crf_end=u(ks[14], (L,), 0.1),
        crf_trans=u(ks[15], (L, L), 0.1),
    )


def forward(params, data, L):
    input_ids = data['bert_ids']                         # (B,S) int32
    attention_mask = data['attention_mask']              # (B,S)
    labels = data['labels']                              # (B,S) int32
    B, S = input_ids.shape

    # TODO(synk): BERT encoder not reproduced; last_hidden_state is emulated with a
    # deterministic embedding-table lookup (gathered directly time-major, no transpose pass).
    emb_sbe = params['emb_table'][jnp.swapaxes(input_ids, 0, 1)].astype(jnp.bfloat16)  # (S,B,E)

    H = params['w_conv'].shape[0]
    Hh = H // 2
    G8 = 8 * Hh

    # Weight prep (small, one-time per call): torch layouts -> kernel layouts, bf16 operands.
    w_conv_k = jnp.transpose(params['w_conv'][:, 0, :, :], (1, 2, 0)).astype(jnp.bfloat16)  # (3,E,H)
    b_conv = params['b_conv'].reshape(1, H)
    w_ih_cat = jnp.concatenate([params['w_ih_f'].T, params['w_ih_b'].T],
                               axis=1).astype(jnp.bfloat16)                                 # (H,8Hh)
    b_cat = jnp.concatenate([params['b_ih_f'] + params['b_hh_f'],
                             params['b_ih_b'] + params['b_hh_b']]).reshape(1, G8)
    w_hh_block = jnp.concatenate([params['w_hh_f'].T, params['w_hh_b'].T],
                                 axis=0).astype(jnp.bfloat16)                               # (2Hh,4Hh)
    w_tag_t = params['w_tag'].T.astype(jnp.bfloat16)                                        # (2Hh,L)
    b_tag = params['b_tag'].reshape(1, L)

    tags = jnp.swapaxes(labels, 0, 1).reshape(S, B, 1).astype(jnp.int32)
    mask = jnp.swapaxes(attention_mask, 0, 1).reshape(S, B, 1).astype(jnp.float32)

    loss = pl.pallas_call(
        fused_kernel,
        out_shape=jax.ShapeDtypeStruct((1, 1), jnp.float32),
        in_specs=[_vmem()] * 13,
        out_specs=_vmem(),
        scratch_shapes=[
            pltpu.VMEM((S, B, G8), jnp.float32),        # hoisted input-gate projections
            pltpu.VMEM((S, B, L), jnp.float32),         # emissions accumulator
            pltpu.VMEM((2 * B, 2 * Hh), jnp.float32),   # block-diagonal [h_f|0 ; 0|h_b]
            pltpu.VMEM((2 * B, Hh), jnp.float32),       # stacked cell state [c_f ; c_b]
        ],
    )(emb_sbe, w_conv_k, b_conv, w_ih_cat, b_cat, w_hh_block, w_tag_t, b_tag,
      params['crf_trans'], params['crf_start'].reshape(1, L),
      params['crf_end'].reshape(1, L), tags, mask)
    return loss[0, 0]


if __name__ == "__main__":
    # small shapes consistent with the module
    B, S = 2, 8
    vocab_size = 100
    embedding_dim = 32      # BERT hidden size stand-in (conv kernel width)
    hidden_dim = 32
    label_num = 5

    key = jax.random.PRNGKey(0)
    k_par, k_ids, k_lab = jax.random.split(key, 3)
    params = init_params(k_par, vocab_size, embedding_dim, hidden_dim, label_num)

    input_ids = jax.random.randint(k_ids, (B, S), 0, vocab_size, jnp.int32)
    labels = jax.random.randint(k_lab, (B, S), 0, label_num, jnp.int32)
    lengths = jnp.array([8, 5], jnp.int32)               # left-aligned masks, mask[:,0]=1
    attention_mask = (jnp.arange(S)[None, :] < lengths[:, None]).astype(jnp.int32)

    data = {'bert_ids': input_ids, 'attention_mask': attention_mask, 'labels': labels}

    loss = forward(params, data, label_num)
    loss = jax.block_until_ready(loss)
    assert jnp.isfinite(loss), f"non-finite loss: {loss}"
    print("KERNEL_OK")
</pallas_src>

<mosaic_0001>
module attributes {stable_mosaic.version = 11 : i64} {
  func.func @fused_kernel(%arg0: memref<8x2x32xbf16, #tpu.memory_space<vmem>>, %arg1: memref<3x32x32xbf16, #tpu.memory_space<vmem>>, %arg2: memref<1x32xf32, #tpu.memory_space<vmem>>, %arg3: memref<32x128xbf16, #tpu.memory_space<vmem>>, %arg4: memref<1x128xf32, #tpu.memory_space<vmem>>, %arg5: memref<32x64xbf16, #tpu.memory_space<vmem>>, %arg6: memref<32x5xbf16, #tpu.memory_space<vmem>>, %arg7: memref<1x5xf32, #tpu.memory_space<vmem>>, %arg8: memref<5x5xf32, #tpu.memory_space<vmem>>, %arg9: memref<1x5xf32, #tpu.memory_space<vmem>>, %arg10: memref<1x5xf32, #tpu.memory_space<vmem>>, %arg11: memref<8x2x1xi32, #tpu.memory_space<vmem>>, %arg12: memref<8x2x1xf32, #tpu.memory_space<vmem>>, %arg13: memref<1x1xf32, #tpu.memory_space<vmem>>, %arg14: memref<8x2x128xf32, #tpu.memory_space<vmem>>, %arg15: memref<8x2x5xf32, #tpu.memory_space<vmem>>, %arg16: memref<4x32xf32, #tpu.memory_space<vmem>>, %arg17: memref<4x16xf32, #tpu.memory_space<vmem>>) attributes {dimension_semantics = [], scalar_prefetch = 0 : i64, scratch_operands = 4 : i64, tpu.core_type = #tpu.core_type<tc>} {
    %c0 = arith.constant 0 : index
    %c0_0 = arith.constant 0 : index
    %c0_1 = arith.constant 0 : index
    %0 = vector.load %arg0[%c0, %c0_0, %c0_1] : memref<8x2x32xbf16, #tpu.memory_space<vmem>>, vector<8x2x32xbf16>
    %c0_2 = arith.constant 0 : index
    %c0_3 = arith.constant 0 : index
    %c0_4 = arith.constant 0 : index
    %1 = vector.load %arg1[%c0_2, %c0_3, %c0_4] : memref<3x32x32xbf16, #tpu.memory_space<vmem>>, vector<1x32x32xbf16>
    %2 = vector.shape_cast %1 : vector<1x32x32xbf16> to vector<32x32xbf16>
    "tpu.trace_start"() <{level = 10 : i32, message = "sbe,eh->sbh"}> : () -> ()
    %cst = arith.constant dense<0.000000e+00> : vector<8x2x32xf32>
    %3 = tpu.matmul %0, %2, %cst {dimension_numbers = #tpu.dot_dimension_numbers<[2], [0], [0, 1], [1], [0, 0, 0, 1, 1, 1], [], []>} : vector<8x2x32xbf16>, vector<32x32xbf16>, vector<8x2x32xf32> -> vector<8x2x32xf32>
    "tpu.trace_stop"() : () -> ()
    %c1 = arith.constant 1 : index
    %c0_5 = arith.constant 0 : index
    %c0_6 = arith.constant 0 : index
    %4 = vector.load %arg1[%c1, %c0_5, %c0_6] : memref<3x32x32xbf16, #tpu.memory_space<vmem>>, vector<1x32x32xbf16>
    %5 = vector.shape_cast %4 : vector<1x32x32xbf16> to vector<32x32xbf16>
    "tpu.trace_start"() <{level = 10 : i32, message = "sbe,eh->sbh"}> : () -> ()
    %cst_7 = arith.constant dense<0.000000e+00> : vector<8x2x32xf32>
    %6 = tpu.matmul %0, %5, %cst_7 {dimension_numbers = #tpu.dot_dimension_numbers<[2], [0], [0, 1], [1], [0, 0, 0, 1, 1, 1], [], []>} : vector<8x2x32xbf16>, vector<32x32xbf16>, vector<8x2x32xf32> -> vector<8x2x32xf32>
    "tpu.trace_stop"() : () -> ()
    %c2 = arith.constant 2 : index
    %c0_8 = arith.constant 0 : index
    %c0_9 = arith.constant 0 : index
    %7 = vector.load %arg1[%c2, %c0_8, %c0_9] : memref<3x32x32xbf16, #tpu.memory_space<vmem>>, vector<1x32x32xbf16>
    %8 = vector.shape_cast %7 : vector<1x32x32xbf16> to vector<32x32xbf16>
    "tpu.trace_start"() <{level = 10 : i32, message = "sbe,eh->sbh"}> : () -> ()
    %cst_10 = arith.constant dense<0.000000e+00> : vector<8x2x32xf32>
    %9 = tpu.matmul %0, %8, %cst_10 {dimension_numbers = #tpu.dot_dimension_numbers<[2], [0], [0, 1], [1], [0, 0, 0, 1, 1, 1], [], []>} : vector<8x2x32xbf16>, vector<32x32xbf16>, vector<8x2x32xf32> -> vector<8x2x32xf32>
    %cst_11 = arith.constant 0.000000e+00 : f32
    "tpu.trace_stop"() : () -> ()
    %10 = vector.broadcast %cst_11 : f32 to vector<1x2x32xf32>
    %c0_12 = arith.constant 0 : index
    %c0_13 = arith.constant 0 : index
    %11 = vector.load %arg2[%c0_12, %c0_13] : memref<1x32xf32, #tpu.memory_space<vmem>>, vector<1x32xf32>
    %12 = vector.shape_cast %11 : vector<1x32xf32> to vector<1x1x32xf32>
    %13 = vector.broadcast %12 : vector<1x1x32xf32> to vector<8x2x32xf32>
    %14 = arith.addf %6, %13 : vector<8x2x32xf32>
    %15 = vector.extract_strided_slice %3 {offsets = [0, 0, 0], sizes = [7, 2, 32], strides = [1, 1, 1]} : vector<8x2x32xf32> to vector<7x2x32xf32>
    %16 = tpu.concatenate %10, %15 in 0 : vector<1x2x32xf32>, vector<7x2x32xf32> -> vector<8x2x32xf32>
    %17 = arith.addf %14, %16 : vector<8x2x32xf32>
    %18 = vector.extract_strided_slice %9 {offsets = [1, 0, 0], sizes = [7, 2, 32], strides = [1, 1, 1]} : vector<8x2x32xf32> to vector<7x2x32xf32>
    %19 = tpu.concatenate %18, %10 in 0 : vector<7x2x32xf32>, vector<1x2x32xf32> -> vector<8x2x32xf32>
    %20 = arith.addf %17, %19 : vector<8x2x32xf32>
    %21 = arith.truncf %20 : vector<8x2x32xf32> to vector<8x2x32xbf16>
    %c0_14 = arith.constant 0 : index
    %c0_15 = arith.constant 0 : index
    %22 = vector.load %arg3[%c0_14, %c0_15] : memref<32x128xbf16, #tpu.memory_space<vmem>>, vector<32x128xbf16>
    "tpu.trace_start"() <{level = 10 : i32, message = "sbh,hg->sbg"}> : () -> ()
    %cst_16 = arith.constant dense<0.000000e+00> : vector<8x2x128xf32>
    %23 = tpu.matmul %21, %22, %cst_16 {dimension_numbers = #tpu.dot_dimension_numbers<[2], [0], [0, 1], [1], [0, 0, 0, 1, 1, 1], [], []>} : vector<8x2x32xbf16>, vector<32x128xbf16>, vector<8x2x128xf32> -> vector<8x2x128xf32>
    "tpu.trace_stop"() : () -> ()
    %c0_17 = arith.constant 0 : index
    %c0_18 = arith.constant 0 : index
    %24 = vector.load %arg4[%c0_17, %c0_18] : memref<1x128xf32, #tpu.memory_space<vmem>>, vector<1x128xf32>
    %25 = vector.shape_cast %24 : vector<1x128xf32> to vector<1x1x128xf32>
    %26 = vector.broadcast %25 : vector<1x1x128xf32> to vector<8x2x128xf32>
    %27 = arith.addf %23, %26 : vector<8x2x128xf32>
    %c0_19 = arith.constant 0 : index
    %c0_20 = arith.constant 0 : index
    %c0_21 = arith.constant 0 : index
    %28 = vector.load %arg14[%c0_19, %c0_20, %c0_21] : memref<8x2x128xf32, #tpu.memory_space<vmem>>, vector<8x2x128xf32>
    tpu.vector_store %arg14[%c0_19, %c0_20, %c0_21], %27 {strides = array<i32>} : memref<8x2x128xf32, #tpu.memory_space<vmem>>, vector<8x2x128xf32>,
    %cst_22 = arith.constant 0.000000e+00 : f32
    %29 = vector.broadcast %cst_22 : f32 to vector<4x32xf32>
    %c0_23 = arith.constant 0 : index
    %c0_24 = arith.constant 0 : index
    %30 = vector.load %arg16[%c0_23, %c0_24] : memref<4x32xf32, #tpu.memory_space<vmem>>, vector<4x32xf32>
    tpu.vector_store %arg16[%c0_23, %c0_24], %29 {strides = array<i32>} : memref<4x32xf32, #tpu.memory_space<vmem>>, vector<4x32xf32>,
    %cst_25 = arith.constant 0.000000e+00 : f32
    %31 = vector.broadcast %cst_25 : f32 to vector<4x16xf32>
    %c0_26 = arith.constant 0 : index
    %c0_27 = arith.constant 0 : index
    %32 = vector.load %arg17[%c0_26, %c0_27] : memref<4x16xf32, #tpu.memory_space<vmem>>, vector<4x16xf32>
    tpu.vector_store %arg17[%c0_26, %c0_27], %31 {strides = array<i32>} : memref<4x16xf32, #tpu.memory_space<vmem>>, vector<4x16xf32>,
    %c0_28 = arith.constant 0 : index
    %c0_29 = arith.constant 0 : index
    %33 = vector.load %arg7[%c0_28, %c0_29] : memref<1x5xf32, #tpu.memory_space<vmem>>, vector<1x5xf32>
    %34 = vector.shape_cast %33 : vector<1x5xf32> to vector<1x1x5xf32>
    %35 = vector.shape_cast %34 : vector<1x1x5xf32> to vector<1x1x5xf32>
    %36 = vector.broadcast %35 : vector<1x1x5xf32> to vector<8x2x5xf32>
    %c0_30 = arith.constant 0 : index
    %c0_31 = arith.constant 0 : index
    %c0_32 = arith.constant 0 : index
    %37 = vector.load %arg15[%c0_30, %c0_31, %c0_32] : memref<8x2x5xf32, #tpu.memory_space<vmem>>, vector<8x2x5xf32>
    tpu.vector_store %arg15[%c0_30, %c0_31, %c0_32], %36 {strides = array<i32>} : memref<8x2x5xf32, #tpu.memory_space<vmem>>, vector<8x2x5xf32>,
    %c0_33 = arith.constant 0 : index
    %c0_34 = arith.constant 0 : index
    %38 = vector.load %arg5[%c0_33, %c0_34] : memref<32x64xbf16, #tpu.memory_space<vmem>>, vector<32x64xbf16>
    %c0_35 = arith.constant 0 : index
    %c0_36 = arith.constant 0 : index
    %39 = vector.load %arg6[%c0_35, %c0_36] : memref<32x5xbf16, #tpu.memory_space<vmem>>, vector<32x5xbf16>
    %c0_i32 = arith.constant 0 : i32
    %c8_i32 = arith.constant 8 : i32
    %40 = arith.addi %c0_i32, %c8_i32 : i32
    %c1_i32 = arith.constant 1 : i32
    scf.for %arg18 = %c0_i32 to %40 step %c1_i32  : i32 {
      %87 = arith.index_cast %arg18 : i32 to index
      %c0_62 = arith.constant 0 : index
      %c0_63 = arith.constant 0 : index
      %88 = vector.load %arg14[%87, %c0_62, %c0_63] : memref<8x2x128xf32, #tpu.memory_space<vmem>>, vector<1x2x128xf32>
      %89 = vector.shape_cast %88 : vector<1x2x128xf32> to vector<2x128xf32>
      %90 = vector.extract_strided_slice %89 {offsets = [0, 0], sizes = [2, 64], strides = [1, 1]} : vector<2x128xf32> to vector<2x64xf32>
      %c7_i32_64 = arith.constant 7 : i32
      %91 = arith.subi %c7_i32_64, %arg18 : i32
      %92 = arith.index_cast %91 : i32 to index
      %c0_65 = arith.constant 0 : index
      %c0_66 = arith.constant 0 : index
      %93 = vector.load %arg14[%92, %c0_65, %c0_66] : memref<8x2x128xf32, #tpu.memory_space<vmem>>, vector<1x2x128xf32>
      %94 = vector.shape_cast %93 : vector<1x2x128xf32> to vector<2x128xf32>
      %95 = vector.extract_strided_slice %94 {offsets = [0, 64], sizes = [2, 64], strides = [1, 1]} : vector<2x128xf32> to vector<2x64xf32>
      %c0_67 = arith.constant 0 : index
      %c0_68 = arith.constant 0 : index
      %96 = vector.load %arg16[%c0_67, %c0_68] : memref<4x32xf32, #tpu.memory_space<vmem>>, vector<4x32xf32>
      %97 = arith.truncf %96 : vector<4x32xf32> to vector<4x32xbf16>
      %98 = tpu.concatenate %90, %95 in 0 : vector<2x64xf32>, vector<2x64xf32> -> vector<4x64xf32>
      %cst_69 = arith.constant dense<0.000000e+00> : vector<4x64xf32>
      %99 = tpu.matmul %97, %38, %cst_69 {dimension_numbers = #tpu.dot_dimension_numbers<[1], [0], [0], [1], [0, 0, 1, 1], [], []>} : vector<4x32xbf16>, vector<32x64xbf16>, vector<4x64xf32> -> vector<4x64xf32>
      %100 = arith.addf %98, %99 : vector<4x64xf32>
      %101 = vector.extract_strided_slice %100 {offsets = [0, 0], sizes = [4, 16], strides = [1, 1]} : vector<4x64xf32> to vector<4x16xf32>
      %102 = arith.negf %101 : vector<4x16xf32>
      %103 = math.exp %102 : vector<4x16xf32>
      %cst_70 = arith.constant 1.000000e+00 : f32
      %104 = vector.broadcast %cst_70 : f32 to vector<4x16xf32>
      %105 = arith.addf %104, %103 : vector<4x16xf32>
      %106 = arith.divf %104, %105 : vector<4x16xf32>
      %107 = vector.extract_strided_slice %100 {offsets = [0, 16], sizes = [4, 16], strides = [1, 1]} : vector<4x64xf32> to vector<4x16xf32>
      %108 = arith.negf %107 : vector<4x16xf32>
      %109 = math.exp %108 : vector<4x16xf32>
      %cst_71 = arith.constant 1.000000e+00 : f32
      %110 = vector.broadcast %cst_71 : f32 to vector<4x16xf32>
      %111 = arith.addf %110, %109 : vector<4x16xf32>
      %112 = arith.divf %110, %111 : vector<4x16xf32>
      %113 = vector.extract_strided_slice %100 {offsets = [0, 32], sizes = [4, 16], strides = [1, 1]} : vector<4x64xf32> to vector<4x16xf32>
      %114 = math.tanh %113 : vector<4x16xf32>
      %115 = vector.extract_strided_slice %100 {offsets = [0, 48], sizes = [4, 16], strides = [1, 1]} : vector<4x64xf32> to vector<4x16xf32>
      %116 = arith.negf %115 : vector<4x16xf32>
      %117 = math.exp %116 : vector<4x16xf32>
      %cst_72 = arith.constant 1.000000e+00 : f32
      %118 = vector.broadcast %cst_72 : f32 to vector<4x16xf32>
      %119 = arith.addf %118, %117 : vector<4x16xf32>
      %120 = arith.divf %118, %119 : vector<4x16xf32>
      %c0_73 = arith.constant 0 : index
      %c0_74 = arith.constant 0 : index
      %121 = vector.load %arg17[%c0_73, %c0_74] : memref<4x16xf32, #tpu.memory_space<vmem>>, vector<4x16xf32>
      %122 = arith.mulf %112, %121 : vector<4x16xf32>
      %123 = arith.mulf %106, %114 : vector<4x16xf32>
      %124 = arith.addf %122, %123 : vector<4x16xf32>
      %125 = math.tanh %124 : vector<4x16xf32>
      %126 = arith.mulf %120, %125 : vector<4x16xf32>
      %c0_75 = arith.constant 0 : index
      %c0_76 = arith.constant 0 : index
      %127 = vector.load %arg17[%c0_75, %c0_76] : memref<4x16xf32, #tpu.memory_space<vmem>>, vector<4x16xf32>
      tpu.vector_store %arg17[%c0_75, %c0_76], %124 {strides = array<i32>} : memref<4x16xf32, #tpu.memory_space<vmem>>, vector<4x16xf32>,
      %128 = vector.extract_strided_slice %126 {offsets = [0, 0], sizes = [2, 16], strides = [1, 1]} : vector<4x16xf32> to vector<2x16xf32>
      %c0_77 = arith.constant 0 : index
      %c0_78 = arith.constant 0 : index
      %129 = vector.load %arg16[%c0_77, %c0_78] : memref<4x32xf32, #tpu.memory_space<vmem>>, vector<2x16xf32>
      tpu.vector_store %arg16[%c0_77, %c0_78], %128 {strides = array<i32>} : memref<4x32xf32, #tpu.memory_space<vmem>>, vector<2x16xf32>,
      %130 = vector.extract_strided_slice %126 {offsets = [2, 0], sizes = [2, 16], strides = [1, 1]} : vector<4x16xf32> to vector<2x16xf32>
      %c2_79 = arith.constant 2 : index
      %c16 = arith.constant 16 : index
      %131 = vector.load %arg16[%c2_79, %c16] : memref<4x32xf32, #tpu.memory_space<vmem>>, vector<2x16xf32>
      tpu.vector_store %arg16[%c2_79, %c16], %130 {strides = array<i32>} : memref<4x32xf32, #tpu.memory_space<vmem>>, vector<2x16xf32>,
      %c0_80 = arith.constant 0 : index
      %c0_81 = arith.constant 0 : index
      %132 = vector.load %arg16[%c0_80, %c0_81] : memref<4x32xf32, #tpu.memory_space<vmem>>, vector<4x32xf32>
      %133 = arith.truncf %132 : vector<4x32xf32> to vector<4x32xbf16>
      %cst_82 = arith.constant dense<0.000000e+00> : vector<4x5xf32>
      %134 = tpu.matmul %133, %39, %cst_82 {dimension_numbers = #tpu.dot_dimension_numbers<[1], [0], [0], [1], [0, 0, 1, 1], [], []>} : vector<4x32xbf16>, vector<32x5xbf16>, vector<4x5xf32> -> vector<4x5xf32>
      %135 = arith.index_cast %arg18 : i32 to index
      %c0_83 = arith.constant 0 : index
      %c0_84 = arith.constant 0 : index
      %136 = vector.load %arg15[%135, %c0_83, %c0_84] : memref<8x2x5xf32, #tpu.memory_space<vmem>>, vector<1x2x5xf32>
      %137 = vector.shape_cast %136 : vector<1x2x5xf32> to vector<2x5xf32>
      %138 = vector.extract_strided_slice %134 {offsets = [0, 0], sizes = [2, 5], strides = [1, 1]} : vector<4x5xf32> to vector<2x5xf32>
      %139 = arith.addf %137, %138 : vector<2x5xf32>
      %140 = arith.index_cast %arg18 : i32 to index
      %c0_85 = arith.constant 0 : index
      %c0_86 = arith.constant 0 : index
      %141 = vector.load %arg15[%140, %c0_85, %c0_86] : memref<8x2x5xf32, #tpu.memory_space<vmem>>, vector<1x2x5xf32>
      %142 = vector.shape_cast %141 : vector<1x2x5xf32> to vector<2x5xf32>
      %143 = vector.shape_cast %139 : vector<2x5xf32> to vector<1x2x5xf32>
      tpu.vector_store %arg15[%140, %c0_85, %c0_86], %143 {strides = array<i32>} : memref<8x2x5xf32, #tpu.memory_space<vmem>>, vector<1x2x5xf32>,
      %c7_i32_87 = arith.constant 7 : i32
      %144 = arith.subi %c7_i32_87, %arg18 : i32
      %145 = arith.index_cast %144 : i32 to index
      %c0_88 = arith.constant 0 : index
      %c0_89 = arith.constant 0 : index
      %146 = vector.load %arg15[%145, %c0_88, %c0_89] : memref<8x2x5xf32, #tpu.memory_space<vmem>>, vector<1x2x5xf32>
      %147 = vector.shape_cast %146 : vector<1x2x5xf32> to vector<2x5xf32>
      %148 = vector.extract_strided_slice %134 {offsets = [2, 0], sizes = [2, 5], strides = [1, 1]} : vector<4x5xf32> to vector<2x5xf32>
      %149 = arith.addf %147, %148 : vector<2x5xf32>
      %c7_i32_90 = arith.constant 7 : i32
      %150 = arith.subi %c7_i32_90, %arg18 : i32
      %151 = arith.index_cast %150 : i32 to index
      %c0_91 = arith.constant 0 : index
      %c0_92 = arith.constant 0 : index
      %152 = vector.load %arg15[%151, %c0_91, %c0_92] : memref<8x2x5xf32, #tpu.memory_space<vmem>>, vector<1x2x5xf32>
      %153 = vector.shape_cast %152 : vector<1x2x5xf32> to vector<2x5xf32>
      %154 = vector.shape_cast %149 : vector<2x5xf32> to vector<1x2x5xf32>
      tpu.vector_store %arg15[%151, %c0_91, %c0_92], %154 {strides = array<i32>} : memref<8x2x5xf32, #tpu.memory_space<vmem>>, vector<1x2x5xf32>,
    }
    %c8_i32_37 = arith.constant 8 : i32
    %c0_38 = arith.constant 0 : index
    %c0_39 = arith.constant 0 : index
    %41 = vector.load %arg8[%c0_38, %c0_39] : memref<5x5xf32, #tpu.memory_space<vmem>>, vector<5x5xf32>
    %42 = vector.shape_cast %41 : vector<5x5xf32> to vector<1x5x5xf32>
    %c0_40 = arith.constant 0 : index
    %c0_41 = arith.constant 0 : index
    %43 = vector.load %arg9[%c0_40, %c0_41] : memref<1x5xf32, #tpu.memory_space<vmem>>, vector<1x5xf32>
    %c0_42 = arith.constant 0 : index
    %c0_43 = arith.constant 0 : index
    %44 = vector.load %arg10[%c0_42, %c0_43] : memref<1x5xf32, #tpu.memory_space<vmem>>, vector<1x5xf32>
    %45 = tpu.iota {dimensions = array<i32: 1>} : vector<2x5xi32>
    %c0_44 = arith.constant 0 : index
    %c0_45 = arith.constant 0 : index
    %c0_46 = arith.constant 0 : index
    %46 = vector.load %arg15[%c0_44, %c0_45, %c0_46] : memref<8x2x5xf32, #tpu.memory_space<vmem>>, vector<1x2x5xf32>
    %47 = vector.shape_cast %46 : vector<1x2x5xf32> to vector<2x5xf32>
    %c0_47 = arith.constant 0 : index
    %c0_48 = arith.constant 0 : index
    %c0_49 = arith.constant 0 : index
    %48 = vector.load %arg11[%c0_47, %c0_48, %c0_49] : memref<8x2x1xi32, #tpu.memory_space<vmem>>, vector<1x2x1xi32>
    %49 = vector.shape_cast %48 : vector<1x2x1xi32> to vector<2x1xi32>
    %50 = vector.broadcast %49 : vector<2x1xi32> to vector<2x5xi32>
    %51 = arith.cmpi eq, %45, %50 : vector<2x5xi32>
    %52 = arith.extui %51 : vector<2x5xi1> to vector<2x5xi32>
    %53 = arith.sitofp %52 : vector<2x5xi32> to vector<2x5xf32>
    %54 = vector.broadcast %43 : vector<1x5xf32> to vector<2x5xf32>
    %55 = arith.addf %54, %47 : vector<2x5xf32>
    %56 = arith.mulf %55, %53 : vector<2x5xf32>
    %cst_50 = arith.constant dense<0.000000e+00> : vector<2xf32>
    %57 = vector.multi_reduction <add>, %56, %cst_50 [1] : vector<2x5xf32> to vector<2xf32>
    %58 = vector.shape_cast %57 : vector<2xf32> to vector<2x1xf32>
    %59 = vector.broadcast %43 : vector<1x5xf32> to vector<2x5xf32>
    %60 = arith.addf %59, %47 : vector<2x5xf32>
    %c1_i32_51 = arith.constant 1 : i32
    %c7_i32 = arith.constant 7 : i32
    %61 = arith.addi %c1_i32_51, %c7_i32 : i32
    %c1_i32_52 = arith.constant 1 : i32
    %62:3 = scf.for %arg18 = %c1_i32_51 to %61 step %c1_i32_52 iter_args(%arg19 = %58, %arg20 = %60, %arg21 = %53) -> (vector<2x1xf32>, vector<2x5xf32>, vector<2x5xf32>)  : i32 {
      %87 = arith.index_cast %arg18 : i32 to index
      %c0_62 = arith.constant 0 : index
      %c0_63 = arith.constant 0 : index
      %88 = vector.load %arg12[%87, %c0_62, %c0_63] : memref<8x2x1xf32, #tpu.memory_space<vmem>>, vector<1x2x1xf32>
      %89 = vector.shape_cast %88 : vector<1x2x1xf32> to vector<2x1xf32>
      %90 = arith.index_cast %arg18 : i32 to index
      %c0_64 = arith.constant 0 : index
      %c0_65 = arith.constant 0 : index
      %91 = vector.load %arg15[%90, %c0_64, %c0_65] : memref<8x2x5xf32, #tpu.memory_space<vmem>>, vector<1x2x5xf32>
      %92 = vector.shape_cast %91 : vector<1x2x5xf32> to vector<2x5xf32>
      %93 = arith.index_cast %arg18 : i32 to index
      %c0_66 = arith.constant 0 : index
      %c0_67 = arith.constant 0 : index
      %94 = vector.load %arg11[%93, %c0_66, %c0_67] : memref<8x2x1xi32, #tpu.memory_space<vmem>>, vector<1x2x1xi32>
      %95 = vector.shape_cast %94 : vector<1x2x1xi32> to vector<2x1xi32>
      %96 = vector.broadcast %95 : vector<2x1xi32> to vector<2x5xi32>
      %97 = arith.cmpi eq, %45, %96 : vector<2x5xi32>
      %98 = arith.extui %97 : vector<2x5xi1> to vector<2x5xi32>
      %99 = arith.sitofp %98 : vector<2x5xi32> to vector<2x5xf32>
      %cst_68 = arith.constant dense<0.000000e+00> : vector<2x5xf32>
      %100 = tpu.matmul %arg21, %41, %cst_68 {dimension_numbers = #tpu.dot_dimension_numbers<[1], [0], [0], [1], [0, 0, 1, 1], [], []>} : vector<2x5xf32>, vector<5x5xf32>, vector<2x5xf32> -> vector<2x5xf32>
      %101 = arith.mulf %100, %99 : vector<2x5xf32>
      %cst_69 = arith.constant dense<0.000000e+00> : vector<2xf32>
      %102 = vector.multi_reduction <add>, %101, %cst_69 [1] : vector<2x5xf32> to vector<2xf32>
      %103 = vector.shape_cast %102 : vector<2xf32> to vector<2x1xf32>
      %104 = arith.mulf %92, %99 : vector<2x5xf32>
      %cst_70 = arith.constant dense<0.000000e+00> : vector<2xf32>
      %105 = vector.multi_reduction <add>, %104, %cst_70 [1] : vector<2x5xf32> to vector<2xf32>
      %106 = vector.shape_cast %105 : vector<2xf32> to vector<2x1xf32>
      %107 = arith.addf %103, %106 : vector<2x1xf32>
      %108 = arith.mulf %89, %107 : vector<2x1xf32>
      %109 = arith.addf %arg19, %108 : vector<2x1xf32>
      %110 = vector.shape_cast %arg20 : vector<2x5xf32> to vector<2x5x1xf32>
      %111 = vector.broadcast %110 : vector<2x5x1xf32> to vector<2x5x5xf32>
      %112 = vector.broadcast %42 : vector<1x5x5xf32> to vector<2x5x5xf32>
      %113 = arith.addf %111, %112 : vector<2x5x5xf32>
      %114 = vector.shape_cast %92 : vector<2x5xf32> to vector<2x1x5xf32>
      %115 = vector.broadcast %114 : vector<2x1x5xf32> to vector<2x5x5xf32>
      %116 = arith.addf %113, %115 : vector<2x5x5xf32>
      %cst_71 = arith.constant dense<0xFF800000> : vector<2x5xf32>
      %117 = vector.multi_reduction <maximumf>, %116, %cst_71 [1] : vector<2x5x5xf32> to vector<2x5xf32>
      %118 = vector.shape_cast %117 : vector<2x5xf32> to vector<2x1x5xf32>
      %119 = vector.broadcast %118 : vector<2x1x5xf32> to vector<2x5x5xf32>
      %120 = arith.subf %116, %119 : vector<2x5x5xf32>
      %121 = math.exp %120 : vector<2x5x5xf32>
      %cst_72 = arith.constant dense<0.000000e+00> : vector<2x5xf32>
      %122 = vector.multi_reduction <add>, %121, %cst_72 [1] : vector<2x5x5xf32> to vector<2x5xf32>
      %123 = math.log %122 : vector<2x5xf32>
      %124 = arith.addf %117, %123 : vector<2x5xf32>
      %cst_73 = arith.constant 0.000000e+00 : f32
      %125 = vector.broadcast %cst_73 : f32 to vector<2x1xf32>
      %126 = arith.cmpf ogt, %89, %125 : vector<2x1xf32>
      %127 = vector.shape_cast %126 : vector<2x1xi1> to vector<2x1xi1>
      %128 = vector.broadcast %127 : vector<2x1xi1> to vector<2x5xi1>
      %129 = arith.select %128, %124, %arg20 : vector<2x5xi1>, vector<2x5xf32>
      %cst_74 = arith.constant 0.000000e+00 : f32
      %130 = vector.broadcast %cst_74 : f32 to vector<2x1xf32>
      %131 = arith.cmpf ogt, %89, %130 : vector<2x1xf32>
      %132 = vector.shape_cast %131 : vector<2x1xi1> to vector<2x1xi1>
      %133 = vector.broadcast %132 : vector<2x1xi1> to vector<2x5xi1>
      %134 = arith.select %133, %99, %arg21 : vector<2x5xi1>, vector<2x5xf32>
      scf.yield %109, %129, %134 : vector<2x1xf32>, vector<2x5xf32>, vector<2x5xf32>
    }
    %c7_i32_53 = arith.constant 7 : i32
    %63 = vector.broadcast %44 : vector<1x5xf32> to vector<2x5xf32>
    %64 = arith.mulf %63, %62#2 : vector<2x5xf32>
    %cst_54 = arith.constant dense<0.000000e+00> : vector<2xf32>
    %65 = vector.multi_reduction <add>, %64, %cst_54 [1] : vector<2x5xf32> to vector<2xf32>
    %66 = vector.shape_cast %65 : vector<2xf32> to vector<2x1xf32>
    %67 = arith.addf %62#0, %66 : vector<2x1xf32>
    %68 = vector.broadcast %44 : vector<1x5xf32> to vector<2x5xf32>
    %69 = arith.addf %62#1, %68 : vector<2x5xf32>
    %cst_55 = arith.constant dense<0xFF800000> : vector<2xf32>
    %70 = vector.multi_reduction <maximumf>, %69, %cst_55 [1] : vector<2x5xf32> to vector<2xf32>
    %71 = vector.shape_cast %70 : vector<2xf32> to vector<2x1xf32>
    %72 = vector.broadcast %71 : vector<2x1xf32> to vector<2x5xf32>
    %73 = arith.subf %69, %72 : vector<2x5xf32>
    %74 = math.exp %73 : vector<2x5xf32>
    %cst_56 = arith.constant dense<0.000000e+00> : vector<2xf32>
    %75 = vector.multi_reduction <add>, %74, %cst_56 [1] : vector<2x5xf32> to vector<2xf32>
    %76 = vector.shape_cast %75 : vector<2xf32> to vector<2x1xf32>
    %77 = math.log %76 : vector<2x1xf32>
    %78 = arith.addf %71, %77 : vector<2x1xf32>
    %79 = arith.subf %67, %78 : vector<2x1xf32>
    %cst_57 = arith.constant dense<0.000000e+00> : vector<1xf32>
    %80 = vector.multi_reduction <add>, %79, %cst_57 [0] : vector<2x1xf32> to vector<1xf32>
    %81 = vector.shape_cast %80 : vector<1xf32> to vector<1x1xf32>
    %cst_58 = arith.constant 0.000000e+00 : f32
    %82 = vector.broadcast %cst_58 : f32 to vector<1x1xf32>
    %83 = arith.subf %82, %81 : vector<1x1xf32>
    %cst_59 = arith.constant 2.000000e+00 : f32
    %84 = vector.broadcast %cst_59 : f32 to vector<1x1xf32>
    %85 = arith.divf %83, %84 : vector<1x1xf32>
    %c0_60 = arith.constant 0 : index
    %c0_61 = arith.constant 0 : index
    %86 = vector.load %arg13[%c0_60, %c0_61] : memref<1x1xf32, #tpu.memory_space<vmem>>, vector<1x1xf32>
    tpu.vector_store %arg13[%c0_60, %c0_61], %85 {strides = array<i32>} : memref<1x1xf32, #tpu.memory_space<vmem>>, vector<1x1xf32>,
    return
  }
}

</mosaic_0001>

<llo_original>
// kernel: tpu_custom_call.1
$region0: #{tpu_custom_call.1}
  #allocation0 [shape = 'u32[]', space=smem, size = 0x4, offset = 0x4, fixed_abs, tag = 'smem constant byte address 0x4 - core index']
  #allocation1 [shape = 'u32[144,128]{1,0:T(1,128)}', space=vmem, size = 0x12000, scoped, tag = 'internal scratch']
  #allocation2 [shape = 'f32[8,2,128]{2,1,0:T(2,128)}', space=vmem, size = 0x2000, scoped, tag = 'scratch operand']
  #allocation3 [shape = 'f32[8,2,5]{2,1,0:T(2,128)}', space=vmem, size = 0x2000, scoped, tag = 'scratch operand']
  #allocation4 [shape = 'f32[4,32]{1,0:T(4,128)}', space=vmem, size = 0x800, scoped, tag = 'scratch operand']
  #allocation5 [shape = 'f32[4,16]{1,0:T(4,128)}', space=vmem, size = 0x800, scoped, tag = 'scratch operand']
  %s0 = inlined_call_operand.hbm [shape: bf16[8,2,32], index: 0, kind: input, shape index: {}]
  %s1 = inlined_call_operand.vmem [shape: bf16[3,32,32], index: 1, kind: input, shape index: {}]
  %s2 = inlined_call_operand.hbm [shape: f32[1,32], index: 2, kind: input, shape index: {}]
  %s3 = inlined_call_operand.hbm [shape: bf16[32,128], index: 3, kind: input, shape index: {}]
  %s4 = inlined_call_operand.hbm [shape: f32[1,128], index: 4, kind: input, shape index: {}]
  %s5 = inlined_call_operand.vmem [shape: bf16[32,64], index: 5, kind: input, shape index: {}]
  %s6 = inlined_call_operand.vmem [shape: bf16[32,5], index: 6, kind: input, shape index: {}]
  %s7 = inlined_call_operand.hbm [shape: f32[1,5], index: 7, kind: input, shape index: {}]
  %s8 = inlined_call_operand.hbm [shape: f32[5,5], index: 8, kind: input, shape index: {}]
  %s9 = inlined_call_operand.vmem [shape: f32[1,5], index: 9, kind: input, shape index: {}]
  %s10 = inlined_call_operand.vmem [shape: f32[1,5], index: 10, kind: input, shape index: {}]
  %s11 = inlined_call_operand.vmem [shape: s32[8,2,1], index: 11, kind: input, shape index: {}]
  %s12 = inlined_call_operand.vmem [shape: f32[8,2,1], index: 12, kind: input, shape index: {}]
  %s13 = inlined_call_operand.hbm [shape: f32[1,1], index: 13, kind: output, shape index: {}]
  %s14 = sld [smem:[#allocation0]]
  $region100: #{tpu_custom_call.1} parent=0
    _
  %s16 = ssub.s32 1, %s14
  %s17 = scalar_select 0, %s16, %s14
  $region1: #{tpu_custom_call.1} parent=0
    #allocation6 [shape = 'u8[4096]{0}', space=vmem, size = 0x1000, scoped, tag = 'input window, operand 0, single buffered']
    #allocation7 [shape = 's32[1]{0}', space=sflag, size = 0x4, scoped, tag = 'scoped memory for tpu_custom_call.1']
    #allocation8 [shape = 's32[1]{0}', space=sflag, size = 0x4, scoped, tag = 'scoped memory for tpu_custom_call.1']
    #allocation9 [shape = 'u8[512]{0}', space=vmem, size = 0x400, scoped, tag = 'input window, operand 2, single buffered']
    #allocation10 [shape = 's32[1]{0}', space=sflag, size = 0x4, scoped, tag = 'scoped memory for tpu_custom_call.1']
    #allocation11 [shape = 'u8[8192]{0}', space=vmem, size = 0x2000, scoped, tag = 'input window, operand 3, single buffered']
    #allocation12 [shape = 'u8[512]{0}', space=vmem, size = 0x400, scoped, tag = 'input window, operand 4, single buffered']
    #allocation13 [shape = 's32[1]{0}', space=sflag, size = 0x4, scoped, tag = 'scoped memory for tpu_custom_call.1']
    #allocation14 [shape = 'u8[512]{0}', space=vmem, size = 0x400, scoped, tag = 'input window, operand 7, single buffered']
    #allocation15 [shape = 'u8[4096]{0}', space=vmem, size = 0x1000, scoped, tag = 'input window, operand 8, single buffered']
    #allocation16 [shape = 's32[1]{0}', space=sflag, size = 0x4, scoped, tag = 'scoped memory for tpu_custom_call.1']
    #allocation17 [shape = 'u8[512]{0}', space=vmem, size = 0x400, scoped, tag = 'output window, operand 0, single buffered']
    %18 = vsyncpa [#allocation7], 0
    %19 = vsyncpa [#allocation10], 0
    %20 = vsyncpa [#allocation13], 0
    %21 = vsyncpa [#allocation16], 0
    %22 = vsyncpa [#allocation8], 0
    // Predicated region
    $region2: #{tpu_custom_call.1} parent=1 // pred_check
      _
    $region3: #{tpu_custom_call.1} parent=1 // pred_check_branch
      %24 = sbr.rel (0) target = $region5
    $region4: #{tpu_custom_call.1} parent=1 // pred_region
      %s26 = ssub.s32 128, 128
      %27 = vsyncadd [#allocation7], %s26
      %s28 = sshll.u32 [#allocation6], 4
      %s29 = int_to_ptr.vmem [resolvable:$true] %s28
      %34 = dma.hbm_to_vmem [thread:$0]  %s0, 128, %s29, [#allocation7], 16, 16, 1
    $region5: #{tpu_custom_call.1} parent=1 // pred_fallthru
      _
    // Predicated region
    $region6: #{tpu_custom_call.1} parent=1 // pred_check
      _
    $region7: #{tpu_custom_call.1} parent=1 // pred_check_branch
      %36 = sbr.rel (0) target = $region9
    $region8: #{tpu_custom_call.1} parent=1 // pred_region
      _
    $region9: #{tpu_custom_call.1} parent=1 // pred_fallthru
      _
    // Predicated region
    $region10: #{tpu_custom_call.1} parent=1 // pred_check
      _
    $region11: #{tpu_custom_call.1} parent=1 // pred_check_branch
      %38 = sbr.rel (0) target = $region13
    $region12: #{tpu_custom_call.1} parent=1 // pred_region
      %s40 = ssub.s32 16, 16
      %41 = vsyncadd [#allocation10], %s40
      %s43 = sshll.u32 [#allocation9], 4
      %s44 = int_to_ptr.vmem [resolvable:$true] %s43
      %46 = dma.hbm_to_vmem [thread:$0]  %s2, 16, %s44, [#allocation10]
    $region13: #{tpu_custom_call.1} parent=1 // pred_fallthru
      _
    // Predicated region
    $region14: #{tpu_custom_call.1} parent=1 // pred_check
      _
    $region15: #{tpu_custom_call.1} parent=1 // pred_check_branch
      %48 = sbr.rel (0) target = $region17
    $region16: #{tpu_custom_call.1} parent=1 // pred_region
      %s50 = ssub.s32 256, 256
      %51 = vsyncadd [#allocation10], %s50
      %s52 = sshll.u32 [#allocation11], 4
      %s53 = int_to_ptr.vmem [resolvable:$true] %s52
      %58 = dma.hbm_to_vmem [thread:$0]  %s3, 256, %s53, [#allocation10], 64, 64, 4
    $region17: #{tpu_custom_call.1} parent=1 // pred_fallthru
      _
    // Predicated region
    $region18: #{tpu_custom_call.1} parent=1 // pred_check
      _
    $region19: #{tpu_custom_call.1} parent=1 // pred_check_branch
      %60 = sbr.rel (0) target = $region21
    $region20: #{tpu_custom_call.1} parent=1 // pred_region
      %s62 = ssub.s32 16, 16
      %63 = vsyncadd [#allocation13], %s62
      %s65 = sshll.u32 [#allocation12], 4
      %s66 = int_to_ptr.vmem [resolvable:$true] %s65
      %68 = dma.hbm_to_vmem [thread:$0]  %s4, 16, %s66, [#allocation13]
    $region21: #{tpu_custom_call.1} parent=1 // pred_fallthru
      _
    // Predicated region
    $region22: #{tpu_custom_call.1} parent=1 // pred_check
      _
    $region23: #{tpu_custom_call.1} parent=1 // pred_check_branch
      %70 = sbr.rel (0) target = $region25
    $region24: #{tpu_custom_call.1} parent=1 // pred_region
      _
    $region25: #{tpu_custom_call.1} parent=1 // pred_fallthru
      _
    // Predicated region
    $region26: #{tpu_custom_call.1} parent=1 // pred_check
      _
    $region27: #{tpu_custom_call.1} parent=1 // pred_check_branch
      %72 = sbr.rel (0) target = $region29
    $region28: #{tpu_custom_call.1} parent=1 // pred_region
      _
    $region29: #{tpu_custom_call.1} parent=1 // pred_fallthru
      _
    // Predicated region
    $region30: #{tpu_custom_call.1} parent=1 // pred_check
      _
    $region31: #{tpu_custom_call.1} parent=1 // pred_check_branch
      %74 = sbr.rel (0) target = $region33
    $region32: #{tpu_custom_call.1} parent=1 // pred_region
      %s76 = ssub.s32 16, 16
      %77 = vsyncadd [#allocation13], %s76
      %s79 = sshll.u32 [#allocation14], 4
      %s80 = int_to_ptr.vmem [resolvable:$true] %s79
      %82 = dma.hbm_to_vmem [thread:$0]  %s7, 16, %s80, [#allocation13]
    $region33: #{tpu_custom_call.1} parent=1 // pred_fallthru
      _
    // Predicated region
    $region34: #{tpu_custom_call.1} parent=1 // pred_check
      _
    $region35: #{tpu_custom_call.1} parent=1 // pred_check_branch
      %84 = sbr.rel (0) target = $region37
    $region36: #{tpu_custom_call.1} parent=1 // pred_region
      %s86 = ssub.s32 128, 128
      %87 = vsyncadd [#allocation16], %s86
      %s89 = sshll.u32 [#allocation15], 4
      %s90 = int_to_ptr.vmem [resolvable:$true] %s89
      %92 = dma.hbm_to_vmem [thread:$0]  %s8, 128, %s90, [#allocation16]
    $region37: #{tpu_custom_call.1} parent=1 // pred_fallthru
      _
    // Predicated region
    $region38: #{tpu_custom_call.1} parent=1 // pred_check
      _
    $region39: #{tpu_custom_call.1} parent=1 // pred_check_branch
      %94 = sbr.rel (0) target = $region41
    $region40: #{tpu_custom_call.1} parent=1 // pred_region
      _
    $region41: #{tpu_custom_call.1} parent=1 // pred_fallthru
      _
    // Predicated region
    $region42: #{tpu_custom_call.1} parent=1 // pred_check
      _
    $region43: #{tpu_custom_call.1} parent=1 // pred_check_branch
      %96 = sbr.rel (0) target = $region45
    $region44: #{tpu_custom_call.1} parent=1 // pred_region
      _
    $region45: #{tpu_custom_call.1} parent=1 // pred_fallthru
      _
    // Predicated region
    $region46: #{tpu_custom_call.1} parent=1 // pred_check
      _
    $region47: #{tpu_custom_call.1} parent=1 // pred_check_branch
      %98 = sbr.rel (0) target = $region49
    $region48: #{tpu_custom_call.1} parent=1 // pred_region
      _
    $region49: #{tpu_custom_call.1} parent=1 // pred_fallthru
      _
    // Predicated region
    $region50: #{tpu_custom_call.1} parent=1 // pred_check
      _
    $region51: #{tpu_custom_call.1} parent=1 // pred_check_branch
      %100 = sbr.rel (0) target = $region53
    $region52: #{tpu_custom_call.1} parent=1 // pred_region
      _
    $region53: #{tpu_custom_call.1} parent=1 // pred_fallthru
      _
    // Predicated region
    $region54: #{tpu_custom_call.1} parent=1 // pred_check
      _
    $region55: #{tpu_custom_call.1} parent=1 // pred_check_branch
      %102 = sbr.rel (0) target = $region57
    $region56: #{tpu_custom_call.1} parent=1 // pred_region
      %103 = dma.done [#allocation7], 128
    $region57: #{tpu_custom_call.1} parent=1 // pred_fallthru
      _
    // Predicated region
    $region58: #{tpu_custom_call.1} parent=1 // pred_check
      _
    $region59: #{tpu_custom_call.1} parent=1 // pred_check_branch
      %105 = sbr.rel (0) target = $region61
    $region60: #{tpu_custom_call.1} parent=1 // pred_region
      %106 = dma.done [#allocation10], 16
    $region61: #{tpu_custom_call.1} parent=1 // pred_fallthru
      _
    // Predicated region
    $region62: #{tpu_custom_call.1} parent=1 // pred_check
      _
    $region63: #{tpu_custom_call.1} parent=1 // pred_check_branch
      %108 = sbr.rel (0) target = $region65
    $region64: #{tpu_custom_call.1} parent=1 // pred_region
      %109 = dma.done [#allocation10], 256
    $region65: #{tpu_custom_call.1} parent=1 // pred_fallthru
      _
    // Predicated region
    $region66: #{tpu_custom_call.1} parent=1 // pred_check
      _
    $region67: #{tpu_custom_call.1} parent=1 // pred_check_branch
      %111 = sbr.rel (0) target = $region69
    $region68: #{tpu_custom_call.1} parent=1 // pred_region
      %112 = dma.done [#allocation13], 16
    $region69: #{tpu_custom_call.1} parent=1 // pred_fallthru
      _
    // Predicated region
    $region70: #{tpu_custom_call.1} parent=1 // pred_check
      _
    $region71: #{tpu_custom_call.1} parent=1 // pred_check_branch
      %114 = sbr.rel (0) target = $region73
    $region72: #{tpu_custom_call.1} parent=1 // pred_region
      %115 = dma.done [#allocation13], 16
    $region73: #{tpu_custom_call.1} parent=1 // pred_fallthru
      _
    // Predicated region
    $region74: #{tpu_custom_call.1} parent=1 // pred_check
      _
    $region75: #{tpu_custom_call.1} parent=1 // pred_check_branch
      %117 = sbr.rel (0) target = $region77
    $region76: #{tpu_custom_call.1} parent=1 // pred_region
      %118 = dma.done [#allocation16], 128
    $region77: #{tpu_custom_call.1} parent=1 // pred_fallthru
      _
    %v120 = vld [vmem:[#allocation6] sm:$0x1]
    %v121 = vld [vmem:[#allocation6 + $0x1] sm:$0x1]
    %v122 = vld [vmem:[#allocation6 + $0x2] sm:$0x1]
    %v123 = vld [vmem:[#allocation6 + $0x3] sm:$0x1]
    %v124 = vld [vmem:[#allocation6 + $0x4] sm:$0x1]
    %v125 = vld [vmem:[#allocation6 + $0x5] sm:$0x1]
    %v126 = vld [vmem:[#allocation6 + $0x6] sm:$0x1]
    %v127 = vld [vmem:[#allocation6 + $0x7] sm:$0x1]
    %v128 = vld [vmem:[%s1] sm:$0xf]
    %v129 = vld [vmem:[%s1 + $0x4] sm:$0xf]
    %v130 = vld [vmem:[%s1 + $0x8] sm:$0xf]
    %v131 = vld [vmem:[%s1 + $0xc] sm:$0xf]
    %v140 = vcombine.low %v120, %v121
    %v141 = vcombine.low %v122, %v123
    %v142 = vcombine.low %v124, %v125
    %v143 = vcombine.low %v126, %v127
    %v145 = vunpack.c.l.s4 1966171168
    %v146 = vunpack.c.0.s8 %v145
    %v147 = vlaneseq
    %v148 = vshrl.u32 %v147, 7
    %v149 = vsub.s32 %v146, %v148
    %v150 = vrot.slane %v140, %v149
    %v152 = vunpack.c.l.s4 1966171168
    %v153 = vunpack.c.0.s8 %v152
    %v154 = vlaneseq
    %v155 = vshrl.u32 %v154, 7
    %v156 = vsub.s32 %v153, %v155
    %v157 = vrot.slane %v141, %v156
    %v159 = vunpack.c.l.s4 1966171168
    %v160 = vunpack.c.0.s8 %v159
    %v161 = vlaneseq
    %v162 = vshrl.u32 %v161, 7
    %v163 = vsub.s32 %v160, %v162
    %v164 = vrot.slane %v142, %v163
    %v166 = vunpack.c.l.s4 1966171168
    %v167 = vunpack.c.0.s8 %v166
    %v168 = vlaneseq
    %v169 = vshrl.u32 %v168, 7
    %v170 = vsub.s32 %v167, %v169
    %v171 = vrot.slane %v143, %v170
    %v172 = vcombine.low %v150, %v157
    %v173 = vcombine.low %v164, %v171
    %v175 = vunpack.c.l.s4 1966171168
    %v176 = vunpack.c.0.s8 %v175
    %v177 = vlaneseq
    %v178 = vshrl.u32 %v177, 7
    %v179 = vsub.s32 %v176, %v178
    %v180 = vrot.slane %v172, %v179
    %v182 = vunpack.c.l.s4 1966171168
    %v183 = vunpack.c.0.s8 %v182
    %v184 = vlaneseq
    %v185 = vshrl.u32 %v184, 7
    %v186 = vsub.s32 %v183, %v185
    %v187 = vrot.slane %v173, %v186
    %v188 = vcombine.low %v180, %v187
    %v193 = vunpack.c.l.b16 %v128
    %v194 = vunpack.c.l.b16 %v129
    %v195 = vunpack.c.l.b16 %v130
    %v196 = vunpack.c.l.b16 %v131
    %v197 = vpack.c.b16 %v194, %v193
    %v198 = vpack.c.b16 %v196, %v195
    %vm201 = vcmask 261120
    %v203 = vsel %vm201, %v188, 0
    %205 = vmatprep.subr.bf16.mxu0 0
    %206 = vmatpush1.bf16.msra.mxu0 0
    %207 = vmatprep.subr.bf16.mxu0 0
    %208 = vmatpush1.bf16.msra.mxu0 0
    %209 = vmatprep.subr.bf16.mxu0 0
    %210 = vmatpush1.bf16.msra.mxu0 0
    %211 = vmatprep.subr.bf16.mxu0 0
    %212 = vmatpush1.bf16.msra.mxu0 0
    %213 = vmatprep.subr.bf16.mxu0 0
    %214 = vmatpush1.bf16.msra.mxu0 0
    %215 = vmatprep.subr.bf16.mxu0 0
    %216 = vmatpush1.bf16.msra.mxu0 0
    %217 = vmatprep.subr.bf16.mxu0 0
    %218 = vmatpush1.bf16.msra.mxu0 %v198
    %219 = vmatprep.subr.bf16.mxu0 0
    %220 = vmatpush1.bf16.msra.mxu0 %v197
    %221 = vmatprep.subr.bf16.mxu0 0
    %222 = vmatpush2.bf16.msra.mxu0 0
    %223 = vmatprep.subr.bf16.mxu0 0
    %224 = vmatpush2.bf16.msra.mxu0 0
    %225 = vmatprep.subr.bf16.mxu0 0
    %226 = vmatpush2.bf16.msra.mxu0 0
    %227 = vmatprep.subr.bf16.mxu0 0
    %228 = vmatpush2.bf16.msra.mxu0 0
    %229 = vmatprep.subr.bf16.mxu0 0
    %230 = vmatpush2.bf16.msra.mxu0 0
    %231 = vmatprep.subr.bf16.mxu0 0
    %232 = vmatpush2.bf16.msra.mxu0 0
    %233 = vmatprep.subr.bf16.mxu0 0
    %234 = vmatpush2.bf16.msra.mxu0 0
    %235 = vmatprep.subr.bf16.mxu0 0
    %236 = vmatpush2.bf16.msra.mxu0 0
    %237 = vmatprep.mubr.bf16.mxu0 0
    %238 = vmatmul.mubr.bf16.gmra.mxu0 %v203
    %v239 = vpop.f32.mrf.mxu0
    %v240 = vadd.f32 0.0, %v239
    %v241 = vpop.f32.mrf.mxu0
    %v242 = vpop.f32.mrf.mxu0
    %v243 = vadd.f32 0.0, %v242
    %v244 = vpop.f32.mrf.mxu0
    %245 = vdwg.mxu0
    %v248 = vcombine.high %v240, %v240
    %v250 = vunpack.c.l.s4 1983009808
    %v251 = vunpack.c.0.s8 %v250
    %v252 = vlaneseq
    %v253 = vshrl.u32 %v252, 7
    %v254 = vsub.s32 %v251, %v253
    %v255 = vrot.slane %v240, %v254
    %v257 = vunpack.c.l.s4 1983009808
    %v258 = vunpack.c.0.s8 %v257
    %v259 = vlaneseq
    %v260 = vshrl.u32 %v259, 7
    %v261 = vsub.s32 %v258, %v260
    %v262 = vrot.slane %v248, %v261
    %v263 = vcombine.high %v255, %v255
    %v264 = vcombine.high %v262, %v262
    %v265 = vcombine.high %v243, %v243
    %v267 = vunpack.c.l.s4 1983009808
    %v268 = vunpack.c.0.s8 %v267
    %v269 = vlaneseq
    %v270 = vshrl.u32 %v269, 7
    %v271 = vsub.s32 %v268, %v270
    %v272 = vrot.slane %v243, %v271
    %v274 = vunpack.c.l.s4 1983009808
    %v275 = vunpack.c.0.s8 %v274
    %v276 = vlaneseq
    %v277 = vshrl.u32 %v276, 7
    %v278 = vsub.s32 %v275, %v277
    %v279 = vrot.slane %v265, %v278
    %v280 = vcombine.high %v272, %v272
    %s288 = scalar_lea.vmem %s1, 16
    %v289 = vld [vmem:[%s288] sm:$0xf]
    %v290 = vld [vmem:[%s288 + $0x4] sm:$0xf]
    %v291 = vld [vmem:[%s288 + $0x8] sm:$0xf]
    %v292 = vld [vmem:[%s288 + $0xc] sm:$0xf]
    %s293 = scalar_lea.vmem %s1, 32
    %v294 = vld [vmem:[%s293] sm:$0xf]
    %v295 = vld [vmem:[%s293 + $0x4] sm:$0xf]
    %v296 = vld [vmem:[%s293 + $0x8] sm:$0xf]
    %v297 = vld [vmem:[%s293 + $0xc] sm:$0xf]
    %v302 = vunpack.c.l.b16 %v294
    %v303 = vunpack.c.l.b16 %v295
    %v304 = vunpack.c.l.b16 %v296
    %v305 = vunpack.c.l.b16 %v297
    %v306 = vpack.c.b16 %v303, %v302
    %v307 = vpack.c.b16 %v305, %v304
    %310 = vmatprep.subr.bf16.mxu0 0
    %311 = vmatpush1.bf16.msra.mxu0 0
    %312 = vmatprep.subr.bf16.mxu0 0
    %313 = vmatpush1.bf16.msra.mxu0 0
    %314 = vmatprep.subr.bf16.mxu0 0
    %315 = vmatpush1.bf16.msra.mxu0 0
    %316 = vmatprep.subr.bf16.mxu0 0
    %317 = vmatpush1.bf16.msra.mxu0 0
    %318 = vmatprep.subr.bf16.mxu0 0
    %319 = vmatpush1.bf16.msra.mxu0 0
    %320 = vmatprep.subr.bf16.mxu0 0
    %321 = vmatpush1.bf16.msra.mxu0 0
    %322 = vmatprep.subr.bf16.mxu0 0
    %323 = vmatpush1.bf16.msra.mxu0 %v307
    %324 = vmatprep.subr.bf16.mxu0 0
    %325 = vmatpush1.bf16.msra.mxu0 %v306
    %326 = vmatprep.subr.bf16.mxu0 0
    %327 = vmatpush2.bf16.msra.mxu0 0
    %328 = vmatprep.subr.bf16.mxu0 0
    %329 = vmatpush2.bf16.msra.mxu0 0
    %330 = vmatprep.subr.bf16.mxu0 0
    %331 = vmatpush2.bf16.msra.mxu0 0
    %332 = vmatprep.subr.bf16.mxu0 0
    %333 = vmatpush2.bf16.msra.mxu0 0
    %334 = vmatprep.subr.bf16.mxu0 0
    %335 = vmatpush2.bf16.msra.mxu0 0
    %336 = vmatprep.subr.bf16.mxu0 0
    %337 = vmatpush2.bf16.msra.mxu0 0
    %338 = vmatprep.subr.bf16.mxu0 0
    %339 = vmatpush2.bf16.msra.mxu0 0
    %340 = vmatprep.subr.bf16.mxu0 0
    %341 = vmatpush2.bf16.msra.mxu0 0
    %342 = vmatprep.mubr.bf16.mxu0 0
    %343 = vmatmul.mubr.bf16.gmra.mxu0 %v203
    %v344 = vpop.f32.mrf.mxu0
    %v345 = vadd.f32 0.0, %v344
    %v346 = vpop.f32.mrf.mxu0
    %v347 = vpop.f32.mrf.mxu0
    %v348 = vadd.f32 0.0, %v347
    %v349 = vpop.f32.mrf.mxu0
    %350 = vdwg.mxu0
    %v353 = vcombine.high %v345, %v345
    %v355 = vunpack.c.l.s4 1983009808
    %v356 = vunpack.c.0.s8 %v355
    %v357 = vlaneseq
    %v358 = vshrl.u32 %v357, 7
    %v359 = vsub.s32 %v356, %v358
    %v360 = vrot.slane %v345, %v359
    %v362 = vunpack.c.l.s4 1983009808
    %v363 = vunpack.c.0.s8 %v362
    %v364 = vlaneseq
    %v365 = vshrl.u32 %v364, 7
    %v366 = vsub.s32 %v363, %v365
    %v367 = vrot.slane %v353, %v366
    %v368 = vcombine.high %v360, %v360
    %v369 = vcombine.high %v367, %v367
    %v370 = vcombine.high %v348, %v348
    %v372 = vunpack.c.l.s4 1983009808
    %v373 = vunpack.c.0.s8 %v372
    %v374 = vlaneseq
    %v375 = vshrl.u32 %v374, 7
    %v376 = vsub.s32 %v373, %v375
    %v377 = vrot.slane %v348, %v376
    %v379 = vunpack.c.l.s4 1983009808
    %v380 = vunpack.c.0.s8 %v379
    %v381 = vlaneseq
    %v382 = vshrl.u32 %v381, 7
    %v383 = vsub.s32 %v380, %v382
    %v384 = vrot.slane %v370, %v383
    %v385 = vcombine.high %v377, %v377
    %v386 = vcombine.high %v384, %v384
    %v394 = vld [vmem:[#allocation9] sm:$0x1]
    %v396 = vlaneseq
    %v397 = vshrl.u32 %v396, 7
    %v398 = vsub.s32 0, %v397
    %v399 = vrot.slane %v394, %v398
    %v404 = vunpack.c.l.b16 %v289
    %v405 = vunpack.c.l.b16 %v290
    %v406 = vunpack.c.l.b16 %v291
    %v407 = vunpack.c.l.b16 %v292
    %v408 = vpack.c.b16 %v405, %v404
    %v409 = vpack.c.b16 %v407, %v406
    %v412 = vcombine.low %v399, %v399
    %v414 = vunpack.c.l.s4 1983009808
    %v415 = vunpack.c.0.s8 %v414
    %v416 = vlaneseq
    %v417 = vshrl.u32 %v416, 7
    %v418 = vsub.s32 %v415, %v417
    %v419 = vrot.slane %v412, %v418
    %v420 = vcombine.low %v419, %v419
    %422 = vmatprep.subr.bf16.mxu0 0
    %423 = vmatpush1.bf16.msra.mxu0 0
    %424 = vmatprep.subr.bf16.mxu0 0
    %425 = vmatpush1.bf16.msra.mxu0 0
    %426 = vmatprep.subr.bf16.mxu0 0
    %427 = vmatpush1.bf16.msra.mxu0 0
    %428 = vmatprep.subr.bf16.mxu0 0
    %429 = vmatpush1.bf16.msra.mxu0 0
    %430 = vmatprep.subr.bf16.mxu0 0
    %431 = vmatpush1.bf16.msra.mxu0 0
    %432 = vmatprep.subr.bf16.mxu0 0
    %433 = vmatpush1.bf16.msra.mxu0 0
    %434 = vmatprep.subr.bf16.mxu0 0
    %435 = vmatpush1.bf16.msra.mxu0 %v409
    %436 = vmatprep.subr.bf16.mxu0 0
    %437 = vmatpush1.bf16.msra.mxu0 %v408
    %438 = vmatprep.subr.bf16.mxu0 0
    %439 = vmatpush2.bf16.msra.mxu0 0
    %440 = vmatprep.subr.bf16.mxu0 0
    %441 = vmatpush2.bf16.msra.mxu0 0
    %442 = vmatprep.subr.bf16.mxu0 0
    %443 = vmatpush2.bf16.msra.mxu0 0
    %444 = vmatprep.subr.bf16.mxu0 0
    %445 = vmatpush2.bf16.msra.mxu0 0
    %446 = vmatprep.subr.bf16.mxu0 0
    %447 = vmatpush2.bf16.msra.mxu0 0
    %448 = vmatprep.subr.bf16.mxu0 0
    %449 = vmatpush2.bf16.msra.mxu0 0
    %450 = vmatprep.subr.bf16.mxu0 0
    %451 = vmatpush2.bf16.msra.mxu0 0
    %452 = vmatprep.subr.bf16.mxu0 0
    %453 = vmatpush2.bf16.msra.mxu0 0
    %454 = vmatprep.mubr.bf16.mxu0 0
    %455 = vmatmul.mubr.bf16.gmra.mxu0 %v203
    %v456 = vpop.f32.mrf.mxu0
    %v457 = vadd.f32 %v420, %v456
    %v458 = vpop.f32.mrf.mxu0
    %v459 = vpop.f32.mrf.mxu0
    %v460 = vadd.f32 %v420, %v459
    %v461 = vpop.f32.mrf.mxu0
    %462 = vdwg.mxu0
    %v465 = vcombine.high %v457, %v457
    %v467 = vunpack.c.l.s4 1983009808
    %v468 = vunpack.c.0.s8 %v467
    %v469 = vlaneseq
    %v470 = vshrl.u32 %v469, 7
    %v471 = vsub.s32 %v468, %v470
    %v472 = vrot.slane %v457, %v471
    %v474 = vunpack.c.l.s4 1983009808
    %v475 = vunpack.c.0.s8 %v474
    %v476 = vlaneseq
    %v477 = vshrl.u32 %v476, 7
    %v478 = vsub.s32 %v475, %v477
    %v479 = vrot.slane %v465, %v478
    %v480 = vcombine.high %v472, %v472
    %v481 = vcombine.high %v479, %v479
    %v482 = vcombine.high %v460, %v460
    %v484 = vunpack.c.l.s4 1983009808
    %v485 = vunpack.c.0.s8 %v484
    %v486 = vlaneseq
    %v487 = vshrl.u32 %v486, 7
    %v488 = vsub.s32 %v485, %v487
    %v489 = vrot.slane %v460, %v488
    %v491 = vunpack.c.l.s4 1983009808
    %v492 = vunpack.c.0.s8 %v491
    %v493 = vlaneseq
    %v494 = vshrl.u32 %v493, 7
    %v495 = vsub.s32 %v492, %v494
    %v496 = vrot.slane %v482, %v495
    %v497 = vcombine.high %v489, %v489
    %v498 = vcombine.high %v496, %v496
    %v507 = vadd.f32 %v472, 0.0
    %v508 = vadd.f32 %v480, %v255
    %v509 = vadd.f32 %v479, %v263
    %v510 = vadd.f32 %v481, %v262
    %v511 = vadd.f32 %v489, %v264
    %v512 = vadd.f32 %v497, %v272
    %v513 = vadd.f32 %v496, %v280
    %v514 = vadd.f32 %v498, %v279
    %v515 = vadd.f32 %v507, %v368
    %v516 = vadd.f32 %v508, %v367
    %v517 = vadd.f32 %v509, %v369
    %v518 = vadd.f32 %v510, %v377
    %v519 = vadd.f32 %v511, %v385
    %v520 = vadd.f32 %v512, %v384
    %v521 = vadd.f32 %v513, %v386
    %v522 = vadd.f32 %v514, 0.0
    %v523 = vpack.c.bf16 %v515, %v515
    %v524 = vpack.c.bf16 %v516, %v516
    %v525 = vpack.c.bf16 %v517, %v517
    %v526 = vpack.c.bf16 %v518, %v518
    %v527 = vpack.c.bf16 %v519, %v519
    %v528 = vpack.c.bf16 %v520, %v520
    %v529 = vpack.c.bf16 %v521, %v521
    %v530 = vpack.c.bf16 %v522, %v522
    %v531 = vld [vmem:[#allocation11] sm:$0xf]
    %v532 = vld [vmem:[#allocation11 + $0x4] sm:$0xf]
    %v533 = vld [vmem:[#allocation11 + $0x8] sm:$0xf]
    %v534 = vld [vmem:[#allocation11 + $0xc] sm:$0xf]
    %v535 = vld [vmem:[#allocation12] sm:$0x1]
    %v537 = vlaneseq
    %v538 = vshrl.u32 %v537, 7
    %v539 = vsub.s32 0, %v538
    %v540 = vrot.slane %v535, %v539
    %v549 = vcombine.low %v523, %v524
    %v550 = vcombine.low %v525, %v526
    %v551 = vcombine.low %v527, %v528
    %v552 = vcombine.low %v529, %v530
    %v554 = vunpack.c.l.s4 1966171168
    %v555 = vunpack.c.0.s8 %v554
    %v556 = vlaneseq
    %v557 = vshrl.u32 %v556, 7
    %v558 = vsub.s32 %v555, %v557
    %v559 = vrot.slane %v549, %v558
    %v561 = vunpack.c.l.s4 1966171168
    %v562 = vunpack.c.0.s8 %v561
    %v563 = vlaneseq
    %v564 = vshrl.u32 %v563, 7
    %v565 = vsub.s32 %v562, %v564
    %v566 = vrot.slane %v550, %v565
    %v568 = vunpack.c.l.s4 1966171168
    %v569 = vunpack.c.0.s8 %v568
    %v570 = vlaneseq
    %v571 = vshrl.u32 %v570, 7
    %v572 = vsub.s32 %v569, %v571
    %v573 = vrot.slane %v551, %v572
    %v575 = vunpack.c.l.s4 1966171168
    %v576 = vunpack.c.0.s8 %v575
    %v577 = vlaneseq
    %v578 = vshrl.u32 %v577, 7
    %v579 = vsub.s32 %v576, %v578
    %v580 = vrot.slane %v552, %v579
    %v581 = vcombine.low %v559, %v566
    %v582 = vcombine.low %v573, %v580
    %v584 = vunpack.c.l.s4 1966171168
    %v585 = vunpack.c.0.s8 %v584
    %v586 = vlaneseq
    %v587 = vshrl.u32 %v586, 7
    %v588 = vsub.s32 %v585, %v587
    %v589 = vrot.slane %v581, %v588
    %v591 = vunpack.c.l.s4 1966171168
    %v592 = vunpack.c.0.s8 %v591
    %v593 = vlaneseq
    %v594 = vshrl.u32 %v593, 7
    %v595 = vsub.s32 %v592, %v594
    %v596 = vrot.slane %v582, %v595
    %v597 = vcombine.low %v589, %v596
    %v602 = vunpack.c.l.b16 %v531
    %v603 = vunpack.c.l.b16 %v532
    %v604 = vunpack.c.l.b16 %v533
    %v605 = vunpack.c.l.b16 %v534
    %v606 = vpack.c.b16 %v603, %v602
    %v607 = vpack.c.b16 %v605, %v604
    %v610 = vcombine.low %v540, %v540
    %v612 = vunpack.c.l.s4 1983009808
    %v613 = vunpack.c.0.s8 %v612
    %v614 = vlaneseq
    %v615 = vshrl.u32 %v614, 7
    %v616 = vsub.s32 %v613, %v615
    %v617 = vrot.slane %v610, %v616
    %v618 = vcombine.low %v617, %v617
    %v621 = vsel %vm201, %v597, 0
    %623 = vmatprep.subr.bf16.mxu0 0
    %624 = vmatpush1.bf16.msra.mxu0 0
    %625 = vmatprep.subr.bf16.mxu0 0
    %626 = vmatpush1.bf16.msra.mxu0 0
    %627 = vmatprep.subr.bf16.mxu0 0
    %628 = vmatpush1.bf16.msra.mxu0 0
    %629 = vmatprep.subr.bf16.mxu0 0
    %630 = vmatpush1.bf16.msra.mxu0 0
    %631 = vmatprep.subr.bf16.mxu0 0
    %632 = vmatpush1.bf16.msra.mxu0 0
    %633 = vmatprep.subr.bf16.mxu0 0
    %634 = vmatpush1.bf16.msra.mxu0 0
    %635 = vmatprep.subr.bf16.mxu0 0
    %636 = vmatpush1.bf16.msra.mxu0 %v607
    %637 = vmatprep.subr.bf16.mxu0 0
    %638 = vmatpush1.bf16.msra.mxu0 %v606
    %639 = vmatprep.subr.bf16.mxu0 0
    %640 = vmatpush2.bf16.msra.mxu0 0
    %641 = vmatprep.subr.bf16.mxu0 0
    %642 = vmatpush2.bf16.msra.mxu0 0
    %643 = vmatprep.subr.bf16.mxu0 0
    %644 = vmatpush2.bf16.msra.mxu0 0
    %645 = vmatprep.subr.bf16.mxu0 0
    %646 = vmatpush2.bf16.msra.mxu0 0
    %647 = vmatprep.subr.bf16.mxu0 0
    %648 = vmatpush2.bf16.msra.mxu0 0
    %649 = vmatprep.subr.bf16.mxu0 0
    %650 = vmatpush2.bf16.msra.mxu0 0
    %651 = vmatprep.subr.bf16.mxu0 0
    %652 = vmatpush2.bf16.msra.mxu0 0
    %653 = vmatprep.subr.bf16.mxu0 0
    %654 = vmatpush2.bf16.msra.mxu0 0
    %655 = vmatprep.mubr.bf16.mxu0 0
    %656 = vmatmul.mubr.bf16.gmra.mxu0 %v621
    %v657 = vpop.f32.mrf.mxu0
    %v658 = vadd.f32 %v618, %v657
    %v659 = vpop.f32.mrf.mxu0
    %v660 = vpop.f32.mrf.mxu0
    %v661 = vadd.f32 %v618, %v660
    %v662 = vpop.f32.mrf.mxu0
    %663 = vdwg.mxu0
    %v666 = vcombine.high %v658, %v658
    %v668 = vunpack.c.l.s4 1983009808
    %v669 = vunpack.c.0.s8 %v668
    %v670 = vlaneseq
    %v671 = vshrl.u32 %v670, 7
    %v672 = vsub.s32 %v669, %v671
    %v673 = vrot.slane %v658, %v672
    %v675 = vunpack.c.l.s4 1983009808
    %v676 = vunpack.c.0.s8 %v675
    %v677 = vlaneseq
    %v678 = vshrl.u32 %v677, 7
    %v679 = vsub.s32 %v676, %v678
    %v680 = vrot.slane %v666, %v679
    %v681 = vcombine.high %v673, %v673
    %v682 = vcombine.high %v680, %v680
    %v683 = vcombine.high %v661, %v661
    %v685 = vunpack.c.l.s4 1983009808
    %v686 = vunpack.c.0.s8 %v685
    %v687 = vlaneseq
    %v688 = vshrl.u32 %v687, 7
    %v689 = vsub.s32 %v686, %v688
    %v690 = vrot.slane %v661, %v689
    %v692 = vunpack.c.l.s4 1983009808
    %v693 = vunpack.c.0.s8 %v692
    %v694 = vlaneseq
    %v695 = vshrl.u32 %v694, 7
    %v696 = vsub.s32 %v693, %v695
    %v697 = vrot.slane %v683, %v696
    %v698 = vcombine.high %v690, %v690
    %v699 = vcombine.high %v697, %v697
    %708 = vst [vmem:[#allocation2] sm:$0x3] %v673
    %709 = vst [vmem:[#allocation2 + $0x2] sm:$0x3] %v681
    %710 = vst [vmem:[#allocation2 + $0x4] sm:$0x3] %v680
    %711 = vst [vmem:[#allocation2 + $0x6] sm:$0x3] %v682
    %712 = vst [vmem:[#allocation2 + $0x8] sm:$0x3] %v690
    %713 = vst [vmem:[#allocation2 + $0xa] sm:$0x3] %v698
    %714 = vst [vmem:[#allocation2 + $0xc] sm:$0x3] %v697
    %715 = vst [vmem:[#allocation2 + $0xe] sm:$0x3] %v699
    %vm716 = vcmask 257024
    %717 = vst.msk [vmem:[#allocation4] sm:$0xf] %vm716, 0.0
    %vm718 = vcmask 125952
    %719 = vst.msk [vmem:[#allocation5] sm:$0xf] %vm718, 0.0
    %v720 = vld [vmem:[#allocation14] sm:$0x1]
    %v722 = vlaneseq
    %v723 = vshrl.u32 %v722, 7
    %v724 = vsub.s32 0, %v723
    %v725 = vrot.slane %v720, %v724
    %vm727 = vcmask 33792
    %728 = vst.msk [vmem:[#allocation3] sm:$0x3] %vm727, %v725
    %729 = vst.msk [vmem:[#allocation3 + $0x2] sm:$0x3] %vm727, %v725
    %730 = vst.msk [vmem:[#allocation3 + $0x4] sm:$0x3] %vm727, %v725
    %731 = vst.msk [vmem:[#allocation3 + $0x6] sm:$0x3] %vm727, %v725
    %732 = vst.msk [vmem:[#allocation3 + $0x8] sm:$0x3] %vm727, %v725
    %733 = vst.msk [vmem:[#allocation3 + $0xa] sm:$0x3] %vm727, %v725
    %734 = vst.msk [vmem:[#allocation3 + $0xc] sm:$0x3] %vm727, %v725
    %735 = vst.msk [vmem:[#allocation3 + $0xe] sm:$0x3] %vm727, %v725
    %v736 = vld [vmem:[%s5] sm:$0xf]
    %v737 = vld [vmem:[%s5 + $0x4] sm:$0xf]
    %v738 = vld [vmem:[%s5 + $0x8] sm:$0xf]
    %v739 = vld [vmem:[%s5 + $0xc] sm:$0xf]
    %v740 = vld [vmem:[%s6] sm:$0xf]
    %v741 = vld [vmem:[%s6 + $0x4] sm:$0xf]
    %v742 = vld [vmem:[%s6 + $0x8] sm:$0xf]
    %v743 = vld [vmem:[%s6 + $0xc] sm:$0xf]
    loop: start=0, step=1, limit=8
    $region78: #{tpu_custom_call.1} parent=1 // loop_pre_header
      _
    $region79: #{tpu_custom_call.1} parent=1 // loop_header
      %s745 = sphi 0, %s749
      %p746 = scmp.ge.s32.totalorder %s745, 8
    $region80: #{tpu_custom_call.1} parent=1 // loop_header_branch
      %748 = sbr.rel (%p746) target = $region84
    $region81: #{tpu_custom_call.1} parent=1 // loop_body
      %s750 = smul.u32 %s745, 2
      %s751 = scalar_lea.vmem [#allocation2], %s750
      %v752 = vld [vmem:[%s751] sm:$0x3]
      %s753 = ssub.s32 7, %s745
      %s754 = smul.u32 %s753, 2
      %s755 = scalar_lea.vmem [#allocation2], %s754
      %v756 = vld [vmem:[%s755] sm:$0x3]
      %v757 = vld [vmem:[#allocation4] sm:$0xf]
      %v758 = vpack.c.bf16 %v757, %v757
      %v760 = vrot.slane %v756, 6
      %761 = vrot.lane.b32.xlu0 %v760, 64
      %v762 = vpop.permute.xlu0 %761
      %vm764 = vcmask 1041408
      %v765 = vsel %vm764, %v752, %v762
      %v770 = vunpack.c.l.b16 %v736
      %v771 = vunpack.c.l.b16 %v737
      %v772 = vunpack.c.l.b16 %v738
      %v773 = vunpack.c.l.b16 %v739
      %v774 = vpack.c.b16 %v771, %v770
      %v775 = vpack.c.b16 %v773, %v772
      %v779 = vsel %vm201, %v758, 0
      %781 = vmatprep.subr.bf16.mxu0 0
      %782 = vmatpush1.bf16.msra.mxu0 0
      %783 = vmatprep.subr.bf16.mxu0 0
      %784 = vmatpush1.bf16.msra.mxu0 0
      %785 = vmatprep.subr.bf16.mxu0 0
      %786 = vmatpush1.bf16.msra.mxu0 0
      %787 = vmatprep.subr.bf16.mxu0 0
      %788 = vmatpush1.bf16.msra.mxu0 0
      %789 = vmatprep.subr.bf16.mxu0 0
      %790 = vmatpush1.bf16.msra.mxu0 0
      %791 = vmatprep.subr.bf16.mxu0 0
      %792 = vmatpush1.bf16.msra.mxu0 0
      %793 = vmatprep.subr.bf16.mxu0 0
      %794 = vmatpush1.bf16.msra.mxu0 %v775
      %795 = vmatprep.subr.bf16.mxu0 0
      %796 = vmatpush1.bf16.msra.mxu0 %v774
      %797 = vmatprep.subr.bf16.mxu0 0
      %798 = vmatpush2.bf16.msra.mxu0 0
      %799 = vmatprep.subr.bf16.mxu0 0
      %800 = vmatpush2.bf16.msra.mxu0 0
      %801 = vmatprep.subr.bf16.mxu0 0
      %802 = vmatpush2.bf16.msra.mxu0 0
      %803 = vmatprep.subr.bf16.mxu0 0
      %804 = vmatpush2.bf16.msra.mxu0 0
      %805 = vmatprep.subr.bf16.mxu0 0
      %806 = vmatpush2.bf16.msra.mxu0 0
      %807 = vmatprep.subr.bf16.mxu0 0
      %808 = vmatpush2.bf16.msra.mxu0 0
      %809 = vmatprep.subr.bf16.mxu0 0
      %810 = vmatpush2.bf16.msra.mxu0 0
      %811 = vmatprep.subr.bf16.mxu0 0
      %812 = vmatpush2.bf16.msra.mxu0 0
      %813 = vmatprep.mubr.bf16.mxu0 0
      %814 = vmatmul.mubr.bf16.gmra.mxu0 %v779
      %v815 = vpop.f32.mrf.mxu0
      %v816 = vadd.f32 0.0, %v815
      %v817 = vpop.f32.mrf.mxu0
      %v818 = vpop.f32.mrf.mxu0
      %v819 = vpop.f32.mrf.mxu0
      %820 = vdwg.mxu0
      %v821 = vadd.f32 %v765, %v816
      %v822 = vxor.u32 %v821, 2147483648
      %v823 = vmul.f32 %v822, 1.442695
      %v824 = vpow.pop %v823
      %v825 = vadd.f32 %v824, 1.0
      %v826 = vrcp.pop %v825
      %v827 = vmul.f32 1.0, %v826
      %v828 = vtanh.pop %v821
      %v829 = vld [vmem:[#allocation5] sm:$0xf]
      %831 = vrot.lane.b32.xlu0 %v829, 16
      %v832 = vpop.permute.xlu0 %831
      %v834 = vmul.f32 %v827, %v832
      %836 = vrot.lane.b32.xlu0 %v828, 96
      %v837 = vpop.permute.xlu0 %836
      %v839 = vmul.f32 %v827, %v837
      %841 = vrot.lane.b32.xlu0 %v839, 16
      %v842 = vpop.permute.xlu0 %841
      %v844 = vadd.f32 %v834, %v842
      %v845 = vtanh.pop %v844
      %847 = vrot.lane.b32.xlu0 %v845, 32
      %v848 = vpop.permute.xlu0 %847
      %v850 = vmul.f32 %v827, %v848
      %852 = vrot.lane.b32.xlu0 %v844, 112
      %v853 = vpop.permute.xlu0 %852
      %855 = vst.msk [vmem:[#allocation5] sm:$0xf] %vm718, %v853
      %857 = vrot.lane.b32.xlu0 %v850, 80
      %v858 = vpop.permute.xlu0 %857
      %vm860 = vcmask 123904
      %861 = vst.msk [vmem:[#allocation4] sm:$0x3] %vm860, %v858
      %862 = vrot.lane.b32.xlu0 %v850, 96
      %v863 = vpop.permute.xlu0 %862
      %vm865 = vcmask 257154
      %866 = vst.msk [vmem:[#allocation4] sm:$0xc] %vm865, %v863
      %v867 = vld [vmem:[#allocation4] sm:$0xf]
      %v868 = vpack.c.bf16 %v867, %v867
      %v873 = vunpack.c.l.b16 %v740
      %v874 = vunpack.c.l.b16 %v741
      %v875 = vunpack.c.l.b16 %v742
      %v876 = vunpack.c.l.b16 %v743
      %v877 = vpack.c.b16 %v874, %v873
      %v878 = vpack.c.b16 %v876, %v875
      %v882 = vsel %vm201, %v868, 0
      %884 = vmatprep.subr.bf16.mxu0 0
      %885 = vmatpush1.bf16.msra.mxu0 0
      %886 = vmatprep.subr.bf16.mxu0 0
      %887 = vmatpush1.bf16.msra.mxu0 0
      %888 = vmatprep.subr.bf16.mxu0 0
      %889 = vmatpush1.bf16.msra.mxu0 0
      %890 = vmatprep.subr.bf16.mxu0 0
      %891 = vmatpush1.bf16.msra.mxu0 0
      %892 = vmatprep.subr.bf16.mxu0 0
      %893 = vmatpush1.bf16.msra.mxu0 0
      %894 = vmatprep.subr.bf16.mxu0 0
      %895 = vmatpush1.bf16.msra.mxu0 0
      %896 = vmatprep.subr.bf16.mxu0 0
      %897 = vmatpush1.bf16.msra.mxu0 %v878
      %898 = vmatprep.subr.bf16.mxu0 0
      %899 = vmatpush1.bf16.msra.mxu0 %v877
      %900 = vmatprep.subr.bf16.mxu0 0
      %901 = vmatpush2.bf16.msra.mxu0 0
      %902 = vmatprep.subr.bf16.mxu0 0
      %903 = vmatpush2.bf16.msra.mxu0 0
      %904 = vmatprep.subr.bf16.mxu0 0
      %905 = vmatpush2.bf16.msra.mxu0 0
      %906 = vmatprep.subr.bf16.mxu0 0
      %907 = vmatpush2.bf16.msra.mxu0 0
      %908 = vmatprep.subr.bf16.mxu0 0
      %909 = vmatpush2.bf16.msra.mxu0 0
      %910 = vmatprep.subr.bf16.mxu0 0
      %911 = vmatpush2.bf16.msra.mxu0 0
      %912 = vmatprep.subr.bf16.mxu0 0
      %913 = vmatpush2.bf16.msra.mxu0 0
      %914 = vmatprep.subr.bf16.mxu0 0
      %915 = vmatpush2.bf16.msra.mxu0 0
      %916 = vmatprep.mubr.bf16.mxu0 0
      %917 = vmatmul.mubr.bf16.gmra.mxu0 %v882
      %v918 = vpop.f32.mrf.mxu0
      %v919 = vadd.f32 0.0, %v918
      %v920 = vpop.f32.mrf.mxu0
      %v921 = vpop.f32.mrf.mxu0
      %v922 = vpop.f32.mrf.mxu0
      %923 = vdwg.mxu0
      %s924 = scalar_lea.vmem [#allocation3], %s750
      %v925 = vld [vmem:[%s924] sm:$0x3]
      %v926 = vadd.f32 %v925, %v919
      %927 = vst.msk [vmem:[%s924] sm:$0x3] %vm727, %v926
      %s928 = scalar_lea.vmem [#allocation3], %s754
      %v929 = vld [vmem:[%s928] sm:$0x3]
      %v931 = vrot.slane %v919, 2
      %v933 = vadd.f32 %v929, %v931
      %934 = vst.msk [vmem:[%s928] sm:$0x3] %vm727, %v933
    $region82: #{tpu_custom_call.1} parent=1 // loop_footer
      %s749 = sadd.s32 1, %s745
    $region83: #{tpu_custom_call.1} parent=1 // loop_footer_branch
      %744 = sbr.rel target = $region79
    $region84: #{tpu_custom_call.1} parent=1 // loop_exit
      _
    %v935 = vld [vmem:[#allocation15] sm:$0x1f]
    %v936 = vld [vmem:[%s9] sm:$0x1]
    %v937 = vld [vmem:[%s10] sm:$0x1]
    %v938 = vlaneseq
    %v939 = vand.u32 %v938, 127
    %v940 = vld [vmem:[#allocation3] sm:$0x3]
    %v941 = vld [vmem:[%s11] sm:$0x3]
    %942 = vset.pattern.permute.xlu0 0
    %943 = vperm.xlu0 %942, %v941
    %v944 = vpop.permute.xlu0 %943
    %vm945 = vcmp.eq.s32.totalorder %v939, %v944
    %v946 = vsel %vm945, 1, 0
    %v947 = vcvt.s32.f32 %v946
    %v949 = vlaneseq
    %v950 = vshrl.u32 %v949, 7
    %v951 = vsub.s32 0, %v950
    %v952 = vrot.slane %v936, %v951
    %v954 = vadd.f32 %v952, %v940
    %v955 = vmul.f32 %v954, %v947
    %v956 = vsel %vm727, %v955, 0.0
    %957 = vadd.xlane.f32.xlu0 %v956
    %v958 = vpop.xlane.xlu0 %957
    loop: start=1, step=1, limit=8
    $region85: #{tpu_custom_call.1} parent=1 // loop_pre_header
      _
    $region86: #{tpu_custom_call.1} parent=1 // loop_header
      %s960 = sphi 1, %s964
      %p961 = scmp.ge.s32.totalorder %s960, 8
      %v965 = vphi %v958, %v1069
      %v966 = vphi %v954, %v1173
      %v967 = vphi %v947, %v1174
    $region87: #{tpu_custom_call.1} parent=1 // loop_header_branch
      %963 = sbr.rel (%p961) target = $region91
    $region88: #{tpu_custom_call.1} parent=1 // loop_body
      %s968 = smul.u32 %s960, 2
      %s969 = scalar_lea.vmem %s12, %s968
      %v970 = vld [vmem:[%s969] sm:$0x3]
      %s971 = scalar_lea.vmem [#allocation3], %s968
      %v972 = vld [vmem:[%s971] sm:$0x3]
      %s973 = scalar_lea.vmem %s11, %s968
      %v974 = vld [vmem:[%s973] sm:$0x3]
      %975 = vset.pattern.permute.xlu0 0
      %976 = vperm.xlu0 %975, %v974
      %v977 = vpop.permute.xlu0 %976
      %vm978 = vcmp.eq.s32.totalorder %v939, %v977
      %v979 = vsel %vm978, 1, 0
      %v980 = vcvt.s32.f32 %v979
      %vm981 = vcmask 39936
      %v983 = vsel %vm981, %v967, 0
      %vm985 = vcmask 1044480
      %v987 = vsel %vm985, %v935, 0
      %989 = vmatprep.subr.mxu0 0.0
      %990 = vmatpush1.msra.mxu0 0.0
      %991 = vmatprep.subr.mxu0 0.0
      %992 = vmatpush1.msra.mxu0 0.0
      %993 = vmatprep.subr.mxu0 0.0
      %994 = vmatpush1.msra.mxu0 0.0
      %995 = vmatprep.subr.mxu0 0.0
      %996 = vmatpush1.msra.mxu0 0.0
      %997 = vmatprep.subr.mxu0 0.0
      %998 = vmatpush1.msra.mxu0 0.0
      %999 = vmatprep.subr.mxu0 0.0
      %1000 = vmatpush1.msra.mxu0 0.0
      %1001 = vmatprep.subr.mxu0 0.0
      %1002 = vmatpush1.msra.mxu0 0.0
      %1003 = vmatprep.subr.mxu0 0.0
      %1004 = vmatpush1.msra.mxu0 0.0
      %1005 = vmatprep.subr.mxu0 0.0
      %1006 = vmatpush1.msra.mxu0 0.0
      %1007 = vmatprep.subr.mxu0 0.0
      %1008 = vmatpush1.msra.mxu0 0.0
      %1009 = vmatprep.subr.mxu0 0.0
      %1010 = vmatpush1.msra.mxu0 0.0
      %1011 = vmatprep.subr.mxu0 0.0
      %1012 = vmatpush1.msra.mxu0 0.0
      %1013 = vmatprep.subr.mxu0 0.0
      %1014 = vmatpush1.msra.mxu0 0.0
      %1015 = vmatprep.subr.mxu0 0.0
      %1016 = vmatpush1.msra.mxu0 0.0
      %1017 = vmatprep.subr.mxu0 0.0
      %1018 = vmatpush1.msra.mxu0 0.0
      %1019 = vmatprep.subr.mxu0 0.0
      %1020 = vmatpush1.msra.mxu0 %v987
      %1021 = vmatprep.subr.mxu0 0.0
      %1022 = vmatpush2.msra.mxu0 0.0
      %1023 = vmatprep.subr.mxu0 0.0
      %1024 = vmatpush2.msra.mxu0 0.0
      %1025 = vmatprep.subr.mxu0 0.0
      %1026 = vmatpush2.msra.mxu0 0.0
      %1027 = vmatprep.subr.mxu0 0.0
      %1028 = vmatpush2.msra.mxu0 0.0
      %1029 = vmatprep.subr.mxu0 0.0
      %1030 = vmatpush2.msra.mxu0 0.0
      %1031 = vmatprep.subr.mxu0 0.0
      %1032 = vmatpush2.msra.mxu0 0.0
      %1033 = vmatprep.subr.mxu0 0.0
      %1034 = vmatpush2.msra.mxu0 0.0
      %1035 = vmatprep.subr.mxu0 0.0
      %1036 = vmatpush2.msra.mxu0 0.0
      %1037 = vmatprep.subr.mxu0 0.0
      %1038 = vmatpush2.msra.mxu0 0.0
      %1039 = vmatprep.subr.mxu0 0.0
      %1040 = vmatpush2.msra.mxu0 0.0
      %1041 = vmatprep.subr.mxu0 0.0
      %1042 = vmatpush2.msra.mxu0 0.0
      %1043 = vmatprep.subr.mxu0 0.0
      %1044 = vmatpush2.msra.mxu0 0.0
      %1045 = vmatprep.subr.mxu0 0.0
      %1046 = vmatpush2.msra.mxu0 0.0
      %1047 = vmatprep.subr.mxu0 0.0
      %1048 = vmatpush2.msra.mxu0 0.0
      %1049 = vmatprep.subr.mxu0 0.0
      %1050 = vmatpush2.msra.mxu0 0.0
      %1051 = vmatprep.subr.mxu0 0.0
      %1052 = vmatpush2.msra.mxu0 0.0
      %1053 = vmatprep.mubr.f32.mxu0 0.0
      %1054 = vmatmul.mubr.f32.gmra.mxu0 %v983
      %v1055 = vpop.f32.mrf.mxu0
      %v1056 = vadd.f32 0.0, %v1055
      %v1057 = vpop.f32.mrf.mxu0
      %1058 = vdwg.mxu0
      %v1059 = vmul.f32 %v1056, %v980
      %v1060 = vsel %vm727, %v1059, 0.0
      %1061 = vadd.xlane.f32.xlu0 %v1060
      %v1062 = vpop.xlane.xlu0 %1061
      %v1063 = vmul.f32 %v972, %v980
      %v1064 = vsel %vm727, %v1063, 0.0
      %1065 = vadd.xlane.f32.xlu0 %v1064
      %v1066 = vpop.xlane.xlu0 %1065
      %v1067 = vadd.f32 %v1062, %v1066
      %v1068 = vmul.f32 %v970, %v1067
      %v1069 = vadd.f32 %v965, %v1068
      %v1070 = vlaneseq
      %v1071 = vshrl.u32 %v1070, 7
      %v1072 = vsub.s32 0, %v1071
      %v1073 = vrot.slane %v966, %v1072
      %1075 = vbcast.lane.b32.xlu0 %v1073, 256
      %v1076 = vpop.permute.xlu0 %1075
      %v1077 = vlaneseq
      %v1078 = vshrl.u32 %v1077, 7
      %v1079 = vsub.s32 1, %v1078
      %v1080 = vrot.slane %v966, %v1079
      %1082 = vbcast.lane.b32.xlu0 %v1080, 256
      %v1083 = vpop.permute.xlu0 %1082
      %v1084 = vadd.f32 %v1076, %v935
      %v1085 = vadd.f32 %v1083, %v935
      %v1088 = vunpack.c.l.s4 1966171168
      %v1089 = vunpack.c.0.s8 %v1088
      %v1090 = vlaneseq
      %v1091 = vshrl.u32 %v1090, 7
      %v1092 = vsub.s32 %v1089, %v1091
      %v1093 = vrot.slane %v972, %v1092
      %v1094 = vcombine.high %v1093, %v1093
      %v1096 = vunpack.c.l.s4 1966171168
      %v1097 = vunpack.c.0.s8 %v1096
      %v1098 = vlaneseq
      %v1099 = vshrl.u32 %v1098, 7
      %v1100 = vsub.s32 %v1097, %v1099
      %v1101 = vrot.slane %v1093, %v1100
      %v1103 = vunpack.c.l.s4 1966171168
      %v1104 = vunpack.c.0.s8 %v1103
      %v1105 = vlaneseq
      %v1106 = vshrl.u32 %v1105, 7
      %v1107 = vsub.s32 %v1104, %v1106
      %v1108 = vrot.slane %v1094, %v1107
      %v1109 = vlaneseq
      %v1110 = vshrl.u32 %v1109, 7
      %v1111 = vsub.s32 0, %v1110
      %v1112 = vrot.slane %v1101, %v1111
      %v1113 = vlaneseq
      %v1114 = vshrl.u32 %v1113, 7
      %v1115 = vsub.s32 0, %v1114
      %v1116 = vrot.slane %v1108, %v1115
      %v1119 = vadd.f32 %v1084, %v1112
      %v1120 = vadd.f32 %v1085, %v1116
      %vm1121 = vcmask 36864
      %v1122 = vsel %vm1121, %v1119, -inf
      %v1123 = vrot.slane %v1122, 4
      %v1124 = vmax.f32 %v1122, %v1123
      %v1125 = vrot.slane %v1124, 2
      %v1126 = vmax.f32 %v1124, %v1125
      %v1127 = vrot.slane %v1126, 1
      %v1128 = vmax.f32 %v1126, %v1127
      %v1129 = vsel %vm1121, %v1120, -inf
      %v1130 = vrot.slane %v1129, 4
      %v1131 = vmax.f32 %v1129, %v1130
      %v1132 = vrot.slane %v1131, 2
      %v1133 = vmax.f32 %v1131, %v1132
      %v1134 = vrot.slane %v1133, 1
      %v1135 = vmax.f32 %v1133, %v1134
      %v1136 = vsub.f32 %v1119, %v1128
      %v1137 = vsub.f32 %v1120, %v1135
      %v1138 = vmul.f32 %v1136, 1.442695
      %v1139 = vpow.pop %v1138
      %v1140 = vmul.f32 %v1137, 1.442695
      %v1141 = vpow.pop %v1140
      %v1142 = vsel %vm1121, %v1139, 0.0
      %v1143 = vrot.slane %v1142, 4
      %v1144 = vadd.f32 %v1142, %v1143
      %v1145 = vrot.slane %v1144, 2
      %v1146 = vadd.f32 %v1144, %v1145
      %v1147 = vrot.slane %v1146, 1
      %v1148 = vadd.f32 %v1146, %v1147
      %v1149 = vsel %vm1121, %v1141, 0.0
      %v1150 = vrot.slane %v1149, 4
      %v1151 = vadd.f32 %v1149, %v1150
      %v1152 = vrot.slane %v1151, 2
      %v1153 = vadd.f32 %v1151, %v1152
      %v1154 = vrot.slane %v1153, 1
      %v1155 = vadd.f32 %v1153, %v1154
      %v1156 = vlog2.pop %v1148
      %v1157 = vmul.f32 %v1156, 0.6931472
      %v1158 = vlog2.pop %v1155
      %v1159 = vmul.f32 %v1158, 0.6931472
      %v1160 = vadd.f32 %v1128, %v1157
      %v1161 = vadd.f32 %v1135, %v1159
      %vm1162 = vcmp.gt.f32.partialorder %v970, 0.0
      %v1163 = vsel %vm1162, 1, 0
      %1164 = vset.pattern.permute.xlu0 0
      %1165 = vperm.xlu0 %1164, %v1163
      %v1166 = vpop.permute.xlu0 %1165
      %vm1167 = vcmp.eq.s32.totalorder %v1166, 1
      %vm1170 = vcmask 1041409
      %v1171 = vsel %vm1170, %v1161, %v1160
      %v1173 = vsel %vm1167, %v1171, %v966
      %v1174 = vsel %vm1167, %v980, %v967
    $region89: #{tpu_custom_call.1} parent=1 // loop_footer
      %s964 = sadd.s32 1, %s960
    $region90: #{tpu_custom_call.1} parent=1 // loop_footer_branch
      %959 = sbr.rel target = $region86
    $region91: #{tpu_custom_call.1} parent=1 // loop_exit
      _
    %v1176 = vlaneseq
    %v1177 = vshrl.u32 %v1176, 7
    %v1178 = vsub.s32 0, %v1177
    %v1179 = vrot.slane %v937, %v1178
    %v1181 = vmul.f32 %v1179, %v967
    %v1182 = vsel %vm727, %v1181, 0.0
    %1183 = vadd.xlane.f32.xlu0 %v1182
    %v1184 = vpop.xlane.xlu0 %1183
    %v1185 = vadd.f32 %v965, %v1184
    %v1186 = vadd.f32 %v966, %v1179
    %v1187 = vsel %vm727, %v1186, -inf
    %1188 = vmax.xlane.f32.xlu0 %v1187
    %v1189 = vpop.xlane.xlu0 %1188
    %v1190 = vsub.f32 %v1186, %v1189
    %v1191 = vmul.f32 %v1190, 1.442695
    %v1192 = vpow.pop %v1191
    %v1193 = vsel %vm727, %v1192, 0.0
    %1194 = vadd.xlane.f32.xlu0 %v1193
    %v1195 = vpop.xlane.xlu0 %1194
    %v1196 = vlog2.pop %v1195
    %v1197 = vmul.f32 %v1196, 0.6931472
    %v1198 = vadd.f32 %v1189, %v1197
    %v1199 = vsub.f32 %v1185, %v1198
    %vm1200 = vcmask 1024
    %v1201 = vsel %vm1200, %v1199, 0.0
    %v1202 = vrot.slane %v1201, 4
    %v1203 = vadd.f32 %v1201, %v1202
    %v1204 = vrot.slane %v1203, 2
    %v1205 = vadd.f32 %v1203, %v1204
    %v1206 = vrot.slane %v1205, 1
    %v1207 = vadd.f32 %v1205, %v1206
    %v1208 = vsub.f32 0.0, %v1207
    %v1209 = vrcp.pop 2.0
    %v1210 = vmul.f32 %v1208, %v1209
    %vm1211 = vcmask 0
    %1212 = vst.msk [vmem:[#allocation17] sm:$0x1] %vm1211, %v1210
    // Predicated region
    $region92: #{tpu_custom_call.1} parent=1 // pred_check
      _
    $region93: #{tpu_custom_call.1} parent=1 // pred_check_branch
      %1214 = sbr.rel (0) target = $region95
    $region94: #{tpu_custom_call.1} parent=1 // pred_region
      %s1216 = ssub.s32 16, 16
      %1217 = vsyncadd [#allocation8], %s1216
      %s1219 = sshll.u32 [#allocation17], 4
      %s1220 = int_to_ptr.vmem [resolvable:$true] %s1219
      %1222 = dma.vmem_to_hbm [thread:$0]  %s1220, 16, %s13, [#allocation8]
    $region95: #{tpu_custom_call.1} parent=1 // pred_fallthru
      _
    // Predicated region
    $region96: #{tpu_custom_call.1} parent=1 // pred_check
      _
    $region97: #{tpu_custom_call.1} parent=1 // pred_check_branch
      %1224 = sbr.rel (0) target = $region99
    $region98: #{tpu_custom_call.1} parent=1 // pred_region
      %1225 = dma.done [#allocation8], 16
    $region99: #{tpu_custom_call.1} parent=1 // pred_fallthru
      _
    %1226 = vsyncpa [#allocation7], 1
    %1227 = vsyncpa [#allocation10], 1
    %1228 = vsyncpa [#allocation13], 1
    %1229 = vsyncpa [#allocation16], 1
    %1230 = vsyncpa [#allocation8], 1

</llo_original>
